<compile_context>
chip_gen: v5e
topology: v5e:2x2
jax: 0.10.0
libtpu: 0.0.40
codegen_flags: <defaults>
</compile_context>

<pallas_src>
import functools

import jax
import jax.numpy as jnp
import numpy as np
from jax import lax
from jax.experimental import pallas as pl
from jax.experimental.pallas import tpu as pltpu

# Pinned matmul precision: f32-accurate MXU algorithm, stable across JAX/libtpu versions.
_HP = lax.Precision.HIGHEST


def gru_kernel(x_ref, w_i_ref, w_h_ref, b_x_ref, b_hn_ref, w_out_ref, b_out_ref,
               out_ref):
    """x_ref: (seq*bs, in) time-major.  out_ref: (bs, out)."""
    bs = out_ref.shape[0]
    hidden = w_h_ref.shape[0]
    seq_len = x_ref.shape[0] // bs

    # ---- Hoisted input projection: ONE (seq*bs, in) @ (in, 3H) matmul for all steps ----
    # b_x already contains b_ir+b_hr | b_iz+b_hz | b_in (fused in the wrapper).
    gx = (jnp.dot(x_ref[...], w_i_ref[...],
                  preferred_element_type=jnp.float32, precision=_HP)
          + b_x_ref[...])                                   # (seq*bs, 3H), time-major rows

    w_h = w_h_ref[...]                                      # (H, 3H), loop-invariant
    # Hoisted broadcast (JAX does not CSE broadcast_in_dim across unrolled iterations).
    b_hn_b = jnp.broadcast_to(b_hn_ref[...], (bs, hidden))  # (bs, H)

    # ---- Serial recurrence: h stays in vregs; loop fully unrolled (static seq_len) ----
    # PyTorch's h_0 = zeros(hidden) broadcasts over batch; zeros (bs, H) is identical.
    h = jnp.zeros((bs, hidden), jnp.float32)
    for t in range(seq_len):
        gh = jnp.dot(h, w_h, preferred_element_type=jnp.float32,
                     precision=_HP)                          # (bs, 3H) — the only serial matmul
        gx_t = gx[t * bs:(t + 1) * bs, :]                    # contiguous static row block

        # Fused r/z activation: one EUP sigmoid over 2H lanes instead of two over H.
        rz = jax.nn.sigmoid(gx_t[:, :2 * hidden] + gh[:, :2 * hidden])
        r = rz[:, :hidden]
        z = rz[:, hidden:]
        n = jnp.tanh(gx_t[:, 2 * hidden:] + r * (gh[:, 2 * hidden:] + b_hn_b))

        # Module update h = (1-z)*h + z*n, rewritten as h + z*(n-h).
        h = h + z * (n - h)

    # ---- Final Linear: out = h @ W_out.T + b_out  (dropout p=0.0 is identity) ----
    out_ref[...] = (jnp.dot(h, w_out_ref[...], preferred_element_type=jnp.float32,
                            precision=_HP)
                    + b_out_ref[...])


def prepare_params(params):
    """One-time gate fusion / pre-transpose, OUT of the per-call path.

    Gate order along the fused axis: [r | z | n].  r/z absorb their hidden-side
    biases into b_x (pure adds); only b_hn stays separate (it sits inside r*(...)).
    """
    W_i = jnp.concatenate([params["W_ir"].T, params["W_iz"].T, params["W_in"].T],
                          axis=1)                                           # (in, 3H)
    W_h = jnp.concatenate([params["W_hr"].T, params["W_hz"].T, params["W_hn"].T],
                          axis=1)                                           # (H, 3H)
    b_x = jnp.concatenate([params["b_ir"] + params["b_hr"],
                           params["b_iz"] + params["b_hz"],
                           params["b_in"]])[None, :]                        # (1, 3H)
    return {
        "W_i": W_i,
        "W_h": W_h,
        "b_x": b_x,
        "b_hn": params["b_hn"][None, :],                                    # (1, H)
        "W_out_T": params["W_out"].T,                                       # (H, out)
        "b_out": params["b_out"][None, :],                                  # (1, out)
    }


@jax.jit
def custom_gru_forward(x, fused):
    """x: (bs, seq_len, input_size) f32, fused: prepare_params(...) -> (bs, output_size)."""
    bs, seq_len, input_size = x.shape
    output_size = fused["W_out_T"].shape[1]

    # Time-major, flattened input: the kernel's per-step gate slab becomes a contiguous
    # static row block instead of a middle-axis slice.  Fused with the launch under jit.
    x_tm = jnp.transpose(x, (1, 0, 2)).reshape(seq_len * bs, input_size)

    args = (x_tm, fused["W_i"], fused["W_h"], fused["b_x"], fused["b_hn"],
            fused["W_out_T"], fused["b_out"])
    vmem = pl.BlockSpec(memory_space=pltpu.MemorySpace.VMEM)
    return pl.pallas_call(
        gru_kernel,
        out_shape=jax.ShapeDtypeStruct((bs, output_size), jnp.float32),
        in_specs=[vmem] * len(args),
        out_specs=vmem,
    )(*args)


def init_params(key, input_size, hidden_size, output_size):
    """Deterministic synthetic init mirroring the module's parameter shapes.

    GRU-cell matrices: xavier_uniform; GRU-cell biases: zeros (as in init_weights()).
    Linear: uniform(-1/sqrt(hidden), 1/sqrt(hidden)) for weight and bias.
    """
    def xavier(k, shape):
        fan_out, fan_in = shape
        a = float(np.sqrt(6.0 / (fan_in + fan_out)))
        return jax.random.uniform(k, shape, jnp.float32, -a, a)

    keys = jax.random.split(key, 8)
    params = {
        "W_ir": xavier(keys[0], (hidden_size, input_size)),
        "W_hr": xavier(keys[1], (hidden_size, hidden_size)),
        "W_iz": xavier(keys[2], (hidden_size, input_size)),
        "W_hz": xavier(keys[3], (hidden_size, hidden_size)),
        "W_in": xavier(keys[4], (hidden_size, input_size)),
        "W_hn": xavier(keys[5], (hidden_size, hidden_size)),
        "b_ir": jnp.zeros((hidden_size,), jnp.float32),
        "b_hr": jnp.zeros((hidden_size,), jnp.float32),
        "b_iz": jnp.zeros((hidden_size,), jnp.float32),
        "b_hz": jnp.zeros((hidden_size,), jnp.float32),
        "b_in": jnp.zeros((hidden_size,), jnp.float32),
        "b_hn": jnp.zeros((hidden_size,), jnp.float32),
    }
    bound = 1.0 / float(np.sqrt(hidden_size))
    params["W_out"] = jax.random.uniform(keys[6], (output_size, hidden_size),
                                         jnp.float32, -bound, bound)
    params["b_out"] = jax.random.uniform(keys[7], (output_size,),
                                         jnp.float32, -bound, bound)
    return params


def reference_forward(x, params):
    """Pure-JAX reference replicating the PyTorch forward exactly (pinned precision)."""
    bs, seq_len, _ = x.shape
    hidden_size = params["W_ir"].shape[0]
    dot = functools.partial(jnp.dot, precision=_HP)
    h = jnp.zeros((hidden_size,), jnp.float32)  # broadcasts over batch like the PyTorch code
    for t in range(seq_len):
        xt = x[:, t, :]
        r = jax.nn.sigmoid(dot(xt, params["W_ir"].T) + params["b_ir"]
                           + dot(h, params["W_hr"].T) + params["b_hr"])
        z = jax.nn.sigmoid(dot(xt, params["W_iz"].T) + params["b_iz"]
                           + dot(h, params["W_hz"].T) + params["b_hz"])
        n = jnp.tanh(dot(xt, params["W_in"].T) + params["b_in"]
                     + r * (dot(h, params["W_hn"].T) + params["b_hn"]))
        h = (1.0 - z) * h + z * n
    return dot(h, params["W_out"].T) + params["b_out"]


if __name__ == "__main__":
    bs, seq_len = 2, 8
    input_size, hidden_size, output_size = 16, 32, 8

    key = jax.random.PRNGKey(0)
    k_x, k_p = jax.random.split(key)
    x = jax.random.normal(k_x, (bs, seq_len, input_size), jnp.float32)
    params = init_params(k_p, input_size, hidden_size, output_size)

    fused = prepare_params(params)  # one-time fusion, outside the per-call path

    out = custom_gru_forward(x, fused)
    out = jax.block_until_ready(out)

    ref = reference_forward(x, params)
    np.testing.assert_allclose(np.asarray(out), np.asarray(ref), rtol=1e-5, atol=1e-5)

    print("KERNEL_OK")
</pallas_src>

<mosaic_0001>
module attributes {stable_mosaic.version = 11 : i64} {
  func.func @gru_kernel(%arg0: memref<16x16xf32, #tpu.memory_space<vmem>>, %arg1: memref<16x96xf32, #tpu.memory_space<vmem>>, %arg2: memref<32x96xf32, #tpu.memory_space<vmem>>, %arg3: memref<1x96xf32, #tpu.memory_space<vmem>>, %arg4: memref<1x32xf32, #tpu.memory_space<vmem>>, %arg5: memref<32x8xf32, #tpu.memory_space<vmem>>, %arg6: memref<1x8xf32, #tpu.memory_space<vmem>>, %arg7: memref<2x8xf32, #tpu.memory_space<vmem>>) attributes {dimension_semantics = [], scalar_prefetch = 0 : i64, scratch_operands = 0 : i64, tpu.core_type = #tpu.core_type<tc>} {
    %c0 = arith.constant 0 : index
    %c0_0 = arith.constant 0 : index
    %0 = vector.load %arg0[%c0, %c0_0] : memref<16x16xf32, #tpu.memory_space<vmem>>, vector<16x16xf32>
    %c0_1 = arith.constant 0 : index
    %c0_2 = arith.constant 0 : index
    %1 = vector.load %arg1[%c0_1, %c0_2] : memref<16x96xf32, #tpu.memory_space<vmem>>, vector<16x96xf32>
    %cst = arith.constant dense<0.000000e+00> : vector<16x96xf32>
    %2 = tpu.matmul %0, %1, %cst {dimension_numbers = #tpu.dot_dimension_numbers<[1], [0], [0], [1], [0, 0, 1, 1], [], []>, precision = #tpu.contract_precision<fp32>} : vector<16x16xf32>, vector<16x96xf32>, vector<16x96xf32> -> vector<16x96xf32>
    %c0_3 = arith.constant 0 : index
    %c0_4 = arith.constant 0 : index
    %3 = vector.load %arg3[%c0_3, %c0_4] : memref<1x96xf32, #tpu.memory_space<vmem>>, vector<1x96xf32>
    %4 = vector.broadcast %3 : vector<1x96xf32> to vector<16x96xf32>
    %5 = arith.addf %2, %4 : vector<16x96xf32>
    %c0_5 = arith.constant 0 : index
    %c0_6 = arith.constant 0 : index
    %6 = vector.load %arg2[%c0_5, %c0_6] : memref<32x96xf32, #tpu.memory_space<vmem>>, vector<32x96xf32>
    %c0_7 = arith.constant 0 : index
    %c0_8 = arith.constant 0 : index
    %7 = vector.load %arg4[%c0_7, %c0_8] : memref<1x32xf32, #tpu.memory_space<vmem>>, vector<1x32xf32>
    %8 = vector.shape_cast %7 : vector<1x32xf32> to vector<1x32xf32>
    %9 = vector.broadcast %8 : vector<1x32xf32> to vector<2x32xf32>
    %cst_9 = arith.constant 0.000000e+00 : f32
    %10 = vector.broadcast %cst_9 : f32 to vector<2x32xf32>
    %cst_10 = arith.constant dense<0.000000e+00> : vector<2x96xf32>
    %11 = tpu.matmul %10, %6, %cst_10 {dimension_numbers = #tpu.dot_dimension_numbers<[1], [0], [0], [1], [0, 0, 1, 1], [], []>, precision = #tpu.contract_precision<fp32>} : vector<2x32xf32>, vector<32x96xf32>, vector<2x96xf32> -> vector<2x96xf32>
    %12 = vector.extract_strided_slice %5 {offsets = [0, 0], sizes = [2, 96], strides = [1, 1]} : vector<16x96xf32> to vector<2x96xf32>
    %13 = vector.extract_strided_slice %12 {offsets = [0, 0], sizes = [2, 64], strides = [1, 1]} : vector<2x96xf32> to vector<2x64xf32>
    %14 = vector.extract_strided_slice %11 {offsets = [0, 0], sizes = [2, 64], strides = [1, 1]} : vector<2x96xf32> to vector<2x64xf32>
    %15 = arith.addf %13, %14 : vector<2x64xf32>
    %16 = arith.negf %15 : vector<2x64xf32>
    %17 = math.exp %16 : vector<2x64xf32>
    %cst_11 = arith.constant 1.000000e+00 : f32
    %18 = vector.broadcast %cst_11 : f32 to vector<2x64xf32>
    %19 = arith.addf %18, %17 : vector<2x64xf32>
    %20 = arith.divf %18, %19 : vector<2x64xf32>
    %21 = vector.extract_strided_slice %20 {offsets = [0, 0], sizes = [2, 32], strides = [1, 1]} : vector<2x64xf32> to vector<2x32xf32>
    %22 = vector.extract_strided_slice %20 {offsets = [0, 32], sizes = [2, 32], strides = [1, 1]} : vector<2x64xf32> to vector<2x32xf32>
    %23 = vector.extract_strided_slice %12 {offsets = [0, 64], sizes = [2, 32], strides = [1, 1]} : vector<2x96xf32> to vector<2x32xf32>
    %24 = vector.extract_strided_slice %11 {offsets = [0, 64], sizes = [2, 32], strides = [1, 1]} : vector<2x96xf32> to vector<2x32xf32>
    %25 = arith.addf %24, %9 : vector<2x32xf32>
    %26 = arith.mulf %21, %25 : vector<2x32xf32>
    %27 = arith.addf %23, %26 : vector<2x32xf32>
    %28 = math.tanh %27 : vector<2x32xf32>
    %29 = arith.subf %28, %10 : vector<2x32xf32>
    %30 = arith.mulf %22, %29 : vector<2x32xf32>
    %31 = arith.addf %10, %30 : vector<2x32xf32>
    %cst_12 = arith.constant dense<0.000000e+00> : vector<2x96xf32>
    %32 = tpu.matmul %31, %6, %cst_12 {dimension_numbers = #tpu.dot_dimension_numbers<[1], [0], [0], [1], [0, 0, 1, 1], [], []>, precision = #tpu.contract_precision<fp32>} : vector<2x32xf32>, vector<32x96xf32>, vector<2x96xf32> -> vector<2x96xf32>
    %33 = vector.extract_strided_slice %5 {offsets = [2, 0], sizes = [2, 96], strides = [1, 1]} : vector<16x96xf32> to vector<2x96xf32>
    %34 = vector.extract_strided_slice %33 {offsets = [0, 0], sizes = [2, 64], strides = [1, 1]} : vector<2x96xf32> to vector<2x64xf32>
    %35 = vector.extract_strided_slice %32 {offsets = [0, 0], sizes = [2, 64], strides = [1, 1]} : vector<2x96xf32> to vector<2x64xf32>
    %36 = arith.addf %34, %35 : vector<2x64xf32>
    %37 = arith.negf %36 : vector<2x64xf32>
    %38 = math.exp %37 : vector<2x64xf32>
    %cst_13 = arith.constant 1.000000e+00 : f32
    %39 = vector.broadcast %cst_13 : f32 to vector<2x64xf32>
    %40 = arith.addf %39, %38 : vector<2x64xf32>
    %41 = arith.divf %39, %40 : vector<2x64xf32>
    %42 = vector.extract_strided_slice %41 {offsets = [0, 0], sizes = [2, 32], strides = [1, 1]} : vector<2x64xf32> to vector<2x32xf32>
    %43 = vector.extract_strided_slice %41 {offsets = [0, 32], sizes = [2, 32], strides = [1, 1]} : vector<2x64xf32> to vector<2x32xf32>
    %44 = vector.extract_strided_slice %33 {offsets = [0, 64], sizes = [2, 32], strides = [1, 1]} : vector<2x96xf32> to vector<2x32xf32>
    %45 = vector.extract_strided_slice %32 {offsets = [0, 64], sizes = [2, 32], strides = [1, 1]} : vector<2x96xf32> to vector<2x32xf32>
    %46 = arith.addf %45, %9 : vector<2x32xf32>
    %47 = arith.mulf %42, %46 : vector<2x32xf32>
    %48 = arith.addf %44, %47 : vector<2x32xf32>
    %49 = math.tanh %48 : vector<2x32xf32>
    %50 = arith.subf %49, %31 : vector<2x32xf32>
    %51 = arith.mulf %43, %50 : vector<2x32xf32>
    %52 = arith.addf %31, %51 : vector<2x32xf32>
    %cst_14 = arith.constant dense<0.000000e+00> : vector<2x96xf32>
    %53 = tpu.matmul %52, %6, %cst_14 {dimension_numbers = #tpu.dot_dimension_numbers<[1], [0], [0], [1], [0, 0, 1, 1], [], []>, precision = #tpu.contract_precision<fp32>} : vector<2x32xf32>, vector<32x96xf32>, vector<2x96xf32> -> vector<2x96xf32>
    %54 = vector.extract_strided_slice %5 {offsets = [4, 0], sizes = [2, 96], strides = [1, 1]} : vector<16x96xf32> to vector<2x96xf32>
    %55 = vector.extract_strided_slice %54 {offsets = [0, 0], sizes = [2, 64], strides = [1, 1]} : vector<2x96xf32> to vector<2x64xf32>
    %56 = vector.extract_strided_slice %53 {offsets = [0, 0], sizes = [2, 64], strides = [1, 1]} : vector<2x96xf32> to vector<2x64xf32>
    %57 = arith.addf %55, %56 : vector<2x64xf32>
    %58 = arith.negf %57 : vector<2x64xf32>
    %59 = math.exp %58 : vector<2x64xf32>
    %cst_15 = arith.constant 1.000000e+00 : f32
    %60 = vector.broadcast %cst_15 : f32 to vector<2x64xf32>
    %61 = arith.addf %60, %59 : vector<2x64xf32>
    %62 = arith.divf %60, %61 : vector<2x64xf32>
    %63 = vector.extract_strided_slice %62 {offsets = [0, 0], sizes = [2, 32], strides = [1, 1]} : vector<2x64xf32> to vector<2x32xf32>
    %64 = vector.extract_strided_slice %62 {offsets = [0, 32], sizes = [2, 32], strides = [1, 1]} : vector<2x64xf32> to vector<2x32xf32>
    %65 = vector.extract_strided_slice %54 {offsets = [0, 64], sizes = [2, 32], strides = [1, 1]} : vector<2x96xf32> to vector<2x32xf32>
    %66 = vector.extract_strided_slice %53 {offsets = [0, 64], sizes = [2, 32], strides = [1, 1]} : vector<2x96xf32> to vector<2x32xf32>
    %67 = arith.addf %66, %9 : vector<2x32xf32>
    %68 = arith.mulf %63, %67 : vector<2x32xf32>
    %69 = arith.addf %65, %68 : vector<2x32xf32>
    %70 = math.tanh %69 : vector<2x32xf32>
    %71 = arith.subf %70, %52 : vector<2x32xf32>
    %72 = arith.mulf %64, %71 : vector<2x32xf32>
    %73 = arith.addf %52, %72 : vector<2x32xf32>
    %cst_16 = arith.constant dense<0.000000e+00> : vector<2x96xf32>
    %74 = tpu.matmul %73, %6, %cst_16 {dimension_numbers = #tpu.dot_dimension_numbers<[1], [0], [0], [1], [0, 0, 1, 1], [], []>, precision = #tpu.contract_precision<fp32>} : vector<2x32xf32>, vector<32x96xf32>, vector<2x96xf32> -> vector<2x96xf32>
    %75 = vector.extract_strided_slice %5 {offsets = [6, 0], sizes = [2, 96], strides = [1, 1]} : vector<16x96xf32> to vector<2x96xf32>
    %76 = vector.extract_strided_slice %75 {offsets = [0, 0], sizes = [2, 64], strides = [1, 1]} : vector<2x96xf32> to vector<2x64xf32>
    %77 = vector.extract_strided_slice %74 {offsets = [0, 0], sizes = [2, 64], strides = [1, 1]} : vector<2x96xf32> to vector<2x64xf32>
    %78 = arith.addf %76, %77 : vector<2x64xf32>
    %79 = arith.negf %78 : vector<2x64xf32>
    %80 = math.exp %79 : vector<2x64xf32>
    %cst_17 = arith.constant 1.000000e+00 : f32
    %81 = vector.broadcast %cst_17 : f32 to vector<2x64xf32>
    %82 = arith.addf %81, %80 : vector<2x64xf32>
    %83 = arith.divf %81, %82 : vector<2x64xf32>
    %84 = vector.extract_strided_slice %83 {offsets = [0, 0], sizes = [2, 32], strides = [1, 1]} : vector<2x64xf32> to vector<2x32xf32>
    %85 = vector.extract_strided_slice %83 {offsets = [0, 32], sizes = [2, 32], strides = [1, 1]} : vector<2x64xf32> to vector<2x32xf32>
    %86 = vector.extract_strided_slice %75 {offsets = [0, 64], sizes = [2, 32], strides = [1, 1]} : vector<2x96xf32> to vector<2x32xf32>
    %87 = vector.extract_strided_slice %74 {offsets = [0, 64], sizes = [2, 32], strides = [1, 1]} : vector<2x96xf32> to vector<2x32xf32>
    %88 = arith.addf %87, %9 : vector<2x32xf32>
    %89 = arith.mulf %84, %88 : vector<2x32xf32>
    %90 = arith.addf %86, %89 : vector<2x32xf32>
    %91 = math.tanh %90 : vector<2x32xf32>
    %92 = arith.subf %91, %73 : vector<2x32xf32>
    %93 = arith.mulf %85, %92 : vector<2x32xf32>
    %94 = arith.addf %73, %93 : vector<2x32xf32>
    %cst_18 = arith.constant dense<0.000000e+00> : vector<2x96xf32>
    %95 = tpu.matmul %94, %6, %cst_18 {dimension_numbers = #tpu.dot_dimension_numbers<[1], [0], [0], [1], [0, 0, 1, 1], [], []>, precision = #tpu.contract_precision<fp32>} : vector<2x32xf32>, vector<32x96xf32>, vector<2x96xf32> -> vector<2x96xf32>
    %96 = vector.extract_strided_slice %5 {offsets = [8, 0], sizes = [2, 96], strides = [1, 1]} : vector<16x96xf32> to vector<2x96xf32>
    %97 = vector.extract_strided_slice %96 {offsets = [0, 0], sizes = [2, 64], strides = [1, 1]} : vector<2x96xf32> to vector<2x64xf32>
    %98 = vector.extract_strided_slice %95 {offsets = [0, 0], sizes = [2, 64], strides = [1, 1]} : vector<2x96xf32> to vector<2x64xf32>
    %99 = arith.addf %97, %98 : vector<2x64xf32>
    %100 = arith.negf %99 : vector<2x64xf32>
    %101 = math.exp %100 : vector<2x64xf32>
    %cst_19 = arith.constant 1.000000e+00 : f32
    %102 = vector.broadcast %cst_19 : f32 to vector<2x64xf32>
    %103 = arith.addf %102, %101 : vector<2x64xf32>
    %104 = arith.divf %102, %103 : vector<2x64xf32>
    %105 = vector.extract_strided_slice %104 {offsets = [0, 0], sizes = [2, 32], strides = [1, 1]} : vector<2x64xf32> to vector<2x32xf32>
    %106 = vector.extract_strided_slice %104 {offsets = [0, 32], sizes = [2, 32], strides = [1, 1]} : vector<2x64xf32> to vector<2x32xf32>
    %107 = vector.extract_strided_slice %96 {offsets = [0, 64], sizes = [2, 32], strides = [1, 1]} : vector<2x96xf32> to vector<2x32xf32>
    %108 = vector.extract_strided_slice %95 {offsets = [0, 64], sizes = [2, 32], strides = [1, 1]} : vector<2x96xf32> to vector<2x32xf32>
    %109 = arith.addf %108, %9 : vector<2x32xf32>
    %110 = arith.mulf %105, %109 : vector<2x32xf32>
    %111 = arith.addf %107, %110 : vector<2x32xf32>
    %112 = math.tanh %111 : vector<2x32xf32>
    %113 = arith.subf %112, %94 : vector<2x32xf32>
    %114 = arith.mulf %106, %113 : vector<2x32xf32>
    %115 = arith.addf %94, %114 : vector<2x32xf32>
    %cst_20 = arith.constant dense<0.000000e+00> : vector<2x96xf32>
    %116 = tpu.matmul %115, %6, %cst_20 {dimension_numbers = #tpu.dot_dimension_numbers<[1], [0], [0], [1], [0, 0, 1, 1], [], []>, precision = #tpu.contract_precision<fp32>} : vector<2x32xf32>, vector<32x96xf32>, vector<2x96xf32> -> vector<2x96xf32>
    %117 = vector.extract_strided_slice %5 {offsets = [10, 0], sizes = [2, 96], strides = [1, 1]} : vector<16x96xf32> to vector<2x96xf32>
    %118 = vector.extract_strided_slice %117 {offsets = [0, 0], sizes = [2, 64], strides = [1, 1]} : vector<2x96xf32> to vector<2x64xf32>
    %119 = vector.extract_strided_slice %116 {offsets = [0, 0], sizes = [2, 64], strides = [1, 1]} : vector<2x96xf32> to vector<2x64xf32>
    %120 = arith.addf %118, %119 : vector<2x64xf32>
    %121 = arith.negf %120 : vector<2x64xf32>
    %122 = math.exp %121 : vector<2x64xf32>
    %cst_21 = arith.constant 1.000000e+00 : f32
    %123 = vector.broadcast %cst_21 : f32 to vector<2x64xf32>
    %124 = arith.addf %123, %122 : vector<2x64xf32>
    %125 = arith.divf %123, %124 : vector<2x64xf32>
    %126 = vector.extract_strided_slice %125 {offsets = [0, 0], sizes = [2, 32], strides = [1, 1]} : vector<2x64xf32> to vector<2x32xf32>
    %127 = vector.extract_strided_slice %125 {offsets = [0, 32], sizes = [2, 32], strides = [1, 1]} : vector<2x64xf32> to vector<2x32xf32>
    %128 = vector.extract_strided_slice %117 {offsets = [0, 64], sizes = [2, 32], strides = [1, 1]} : vector<2x96xf32> to vector<2x32xf32>
    %129 = vector.extract_strided_slice %116 {offsets = [0, 64], sizes = [2, 32], strides = [1, 1]} : vector<2x96xf32> to vector<2x32xf32>
    %130 = arith.addf %129, %9 : vector<2x32xf32>
    %131 = arith.mulf %126, %130 : vector<2x32xf32>
    %132 = arith.addf %128, %131 : vector<2x32xf32>
    %133 = math.tanh %132 : vector<2x32xf32>
    %134 = arith.subf %133, %115 : vector<2x32xf32>
    %135 = arith.mulf %127, %134 : vector<2x32xf32>
    %136 = arith.addf %115, %135 : vector<2x32xf32>
    %cst_22 = arith.constant dense<0.000000e+00> : vector<2x96xf32>
    %137 = tpu.matmul %136, %6, %cst_22 {dimension_numbers = #tpu.dot_dimension_numbers<[1], [0], [0], [1], [0, 0, 1, 1], [], []>, precision = #tpu.contract_precision<fp32>} : vector<2x32xf32>, vector<32x96xf32>, vector<2x96xf32> -> vector<2x96xf32>
    %138 = vector.extract_strided_slice %5 {offsets = [12, 0], sizes = [2, 96], strides = [1, 1]} : vector<16x96xf32> to vector<2x96xf32>
    %139 = vector.extract_strided_slice %138 {offsets = [0, 0], sizes = [2, 64], strides = [1, 1]} : vector<2x96xf32> to vector<2x64xf32>
    %140 = vector.extract_strided_slice %137 {offsets = [0, 0], sizes = [2, 64], strides = [1, 1]} : vector<2x96xf32> to vector<2x64xf32>
    %141 = arith.addf %139, %140 : vector<2x64xf32>
    %142 = arith.negf %141 : vector<2x64xf32>
    %143 = math.exp %142 : vector<2x64xf32>
    %cst_23 = arith.constant 1.000000e+00 : f32
    %144 = vector.broadcast %cst_23 : f32 to vector<2x64xf32>
    %145 = arith.addf %144, %143 : vector<2x64xf32>
    %146 = arith.divf %144, %145 : vector<2x64xf32>
    %147 = vector.extract_strided_slice %146 {offsets = [0, 0], sizes = [2, 32], strides = [1, 1]} : vector<2x64xf32> to vector<2x32xf32>
    %148 = vector.extract_strided_slice %146 {offsets = [0, 32], sizes = [2, 32], strides = [1, 1]} : vector<2x64xf32> to vector<2x32xf32>
    %149 = vector.extract_strided_slice %138 {offsets = [0, 64], sizes = [2, 32], strides = [1, 1]} : vector<2x96xf32> to vector<2x32xf32>
    %150 = vector.extract_strided_slice %137 {offsets = [0, 64], sizes = [2, 32], strides = [1, 1]} : vector<2x96xf32> to vector<2x32xf32>
    %151 = arith.addf %150, %9 : vector<2x32xf32>
    %152 = arith.mulf %147, %151 : vector<2x32xf32>
    %153 = arith.addf %149, %152 : vector<2x32xf32>
    %154 = math.tanh %153 : vector<2x32xf32>
    %155 = arith.subf %154, %136 : vector<2x32xf32>
    %156 = arith.mulf %148, %155 : vector<2x32xf32>
    %157 = arith.addf %136, %156 : vector<2x32xf32>
    %cst_24 = arith.constant dense<0.000000e+00> : vector<2x96xf32>
    %158 = tpu.matmul %157, %6, %cst_24 {dimension_numbers = #tpu.dot_dimension_numbers<[1], [0], [0], [1], [0, 0, 1, 1], [], []>, precision = #tpu.contract_precision<fp32>} : vector<2x32xf32>, vector<32x96xf32>, vector<2x96xf32> -> vector<2x96xf32>
    %159 = vector.extract_strided_slice %5 {offsets = [14, 0], sizes = [2, 96], strides = [1, 1]} : vector<16x96xf32> to vector<2x96xf32>
    %160 = vector.extract_strided_slice %159 {offsets = [0, 0], sizes = [2, 64], strides = [1, 1]} : vector<2x96xf32> to vector<2x64xf32>
    %161 = vector.extract_strided_slice %158 {offsets = [0, 0], sizes = [2, 64], strides = [1, 1]} : vector<2x96xf32> to vector<2x64xf32>
    %162 = arith.addf %160, %161 : vector<2x64xf32>
    %163 = arith.negf %162 : vector<2x64xf32>
    %164 = math.exp %163 : vector<2x64xf32>
    %cst_25 = arith.constant 1.000000e+00 : f32
    %165 = vector.broadcast %cst_25 : f32 to vector<2x64xf32>
    %166 = arith.addf %165, %164 : vector<2x64xf32>
    %167 = arith.divf %165, %166 : vector<2x64xf32>
    %168 = vector.extract_strided_slice %167 {offsets = [0, 0], sizes = [2, 32], strides = [1, 1]} : vector<2x64xf32> to vector<2x32xf32>
    %169 = vector.extract_strided_slice %167 {offsets = [0, 32], sizes = [2, 32], strides = [1, 1]} : vector<2x64xf32> to vector<2x32xf32>
    %170 = vector.extract_strided_slice %159 {offsets = [0, 64], sizes = [2, 32], strides = [1, 1]} : vector<2x96xf32> to vector<2x32xf32>
    %171 = vector.extract_strided_slice %158 {offsets = [0, 64], sizes = [2, 32], strides = [1, 1]} : vector<2x96xf32> to vector<2x32xf32>
    %172 = arith.addf %171, %9 : vector<2x32xf32>
    %173 = arith.mulf %168, %172 : vector<2x32xf32>
    %174 = arith.addf %170, %173 : vector<2x32xf32>
    %175 = math.tanh %174 : vector<2x32xf32>
    %176 = arith.subf %175, %157 : vector<2x32xf32>
    %177 = arith.mulf %169, %176 : vector<2x32xf32>
    %178 = arith.addf %157, %177 : vector<2x32xf32>
    %c0_26 = arith.constant 0 : index
    %c0_27 = arith.constant 0 : index
    %179 = vector.load %arg5[%c0_26, %c0_27] : memref<32x8xf32, #tpu.memory_space<vmem>>, vector<32x8xf32>
    %cst_28 = arith.constant dense<0.000000e+00> : vector<2x8xf32>
    %180 = tpu.matmul %178, %179, %cst_28 {dimension_numbers = #tpu.dot_dimension_numbers<[1], [0], [0], [1], [0, 0, 1, 1], [], []>, precision = #tpu.contract_precision<fp32>} : vector<2x32xf32>, vector<32x8xf32>, vector<2x8xf32> -> vector<2x8xf32>
    %c0_29 = arith.constant 0 : index
    %c0_30 = arith.constant 0 : index
    %181 = vector.load %arg6[%c0_29, %c0_30] : memref<1x8xf32, #tpu.memory_space<vmem>>, vector<1x8xf32>
    %182 = vector.broadcast %181 : vector<1x8xf32> to vector<2x8xf32>
    %183 = arith.addf %180, %182 : vector<2x8xf32>
    %c0_31 = arith.constant 0 : index
    %c0_32 = arith.constant 0 : index
    %184 = vector.load %arg7[%c0_31, %c0_32] : memref<2x8xf32, #tpu.memory_space<vmem>>, vector<2x8xf32>
    tpu.vector_store %arg7[%c0_31, %c0_32], %183 {strides = array<i32>} : memref<2x8xf32, #tpu.memory_space<vmem>>, vector<2x8xf32>,
    return
  }
}

</mosaic_0001>

<llo_original>
// kernel: custom_gru_forward.1
$region0: #{custom_gru_forward.1}
  #allocation0 [shape = 'u32[]', space=smem, size = 0x4, offset = 0x4, fixed_abs, tag = 'smem constant byte address 0x4 - core index']
  #allocation1 [shape = 'u32[72,128]{1,0:T(1,128)}', space=vmem, size = 0x9000, scoped, tag = 'internal scratch']
  %s0 = inlined_call_operand.vmem [shape: f32[16,16], index: 0, kind: input, shape index: {}]
  %s1 = inlined_call_operand.vmem [shape: f32[16,96], index: 1, kind: input, shape index: {}]
  %s2 = inlined_call_operand.vmem [shape: f32[32,96], index: 2, kind: input, shape index: {}]
  %s3 = inlined_call_operand.vmem [shape: f32[1,96], index: 3, kind: input, shape index: {}]
  %s4 = inlined_call_operand.vmem [shape: f32[1,32], index: 4, kind: input, shape index: {}]
  %s5 = inlined_call_operand.vmem [shape: f32[32,8], index: 5, kind: input, shape index: {}]
  %s6 = inlined_call_operand.vmem [shape: f32[1,8], index: 6, kind: input, shape index: {}]
  %s7 = inlined_call_operand.hbm [shape: f32[2,8], index: 7, kind: output, shape index: {}]
  %s8 = sld [smem:[#allocation0]]
  $region38: #{custom_gru_forward.1} parent=0
    _
  %s10 = ssub.s32 1, %s8
  %s11 = scalar_select 0, %s10, %s8
  $region1: #{custom_gru_forward.1} parent=0
    #allocation2 [shape = 'u8[1024]{0}', space=vmem, size = 0x400, scoped, tag = 'output window, operand 0, single buffered']
    #allocation3 [shape = 's32[1]{0}', space=sflag, size = 0x4, scoped, tag = 'scoped memory for custom_gru_forward.1']
    %12 = vsyncpa [#allocation3], 0
    // Predicated region
    $region2: #{custom_gru_forward.1} parent=1 // pred_check
      _
    $region3: #{custom_gru_forward.1} parent=1 // pred_check_branch
      %14 = sbr.rel (0) target = $region5
    $region4: #{custom_gru_forward.1} parent=1 // pred_region
      _
    $region5: #{custom_gru_forward.1} parent=1 // pred_fallthru
      _
    // Predicated region
    $region6: #{custom_gru_forward.1} parent=1 // pred_check
      _
    $region7: #{custom_gru_forward.1} parent=1 // pred_check_branch
      %16 = sbr.rel (0) target = $region9
    $region8: #{custom_gru_forward.1} parent=1 // pred_region
      _
    $region9: #{custom_gru_forward.1} parent=1 // pred_fallthru
      _
    // Predicated region
    $region10: #{custom_gru_forward.1} parent=1 // pred_check
      _
    $region11: #{custom_gru_forward.1} parent=1 // pred_check_branch
      %18 = sbr.rel (0) target = $region13
    $region12: #{custom_gru_forward.1} parent=1 // pred_region
      _
    $region13: #{custom_gru_forward.1} parent=1 // pred_fallthru
      _
    // Predicated region
    $region14: #{custom_gru_forward.1} parent=1 // pred_check
      _
    $region15: #{custom_gru_forward.1} parent=1 // pred_check_branch
      %20 = sbr.rel (0) target = $region17
    $region16: #{custom_gru_forward.1} parent=1 // pred_region
      _
    $region17: #{custom_gru_forward.1} parent=1 // pred_fallthru
      _
    // Predicated region
    $region18: #{custom_gru_forward.1} parent=1 // pred_check
      _
    $region19: #{custom_gru_forward.1} parent=1 // pred_check_branch
      %22 = sbr.rel (0) target = $region21
    $region20: #{custom_gru_forward.1} parent=1 // pred_region
      _
    $region21: #{custom_gru_forward.1} parent=1 // pred_fallthru
      _
    // Predicated region
    $region22: #{custom_gru_forward.1} parent=1 // pred_check
      _
    $region23: #{custom_gru_forward.1} parent=1 // pred_check_branch
      %24 = sbr.rel (0) target = $region25
    $region24: #{custom_gru_forward.1} parent=1 // pred_region
      _
    $region25: #{custom_gru_forward.1} parent=1 // pred_fallthru
      _
    // Predicated region
    $region26: #{custom_gru_forward.1} parent=1 // pred_check
      _
    $region27: #{custom_gru_forward.1} parent=1 // pred_check_branch
      %26 = sbr.rel (0) target = $region29
    $region28: #{custom_gru_forward.1} parent=1 // pred_region
      _
    $region29: #{custom_gru_forward.1} parent=1 // pred_fallthru
      _
    %v27 = vld [vmem:[%s0] sm:$0xff]
    %v28 = vld [vmem:[%s0 + $0x8] sm:$0xff]
    %v29 = vld [vmem:[%s1] sm:$0xff]
    %v30 = vld [vmem:[%s1 + $0x8] sm:$0xff]
    %v31 = vld [vmem:[%s3] sm:$0x1]
    %v33 = vperm.slane %v31, 0
    %vm35 = vcmask 130048
    %v37 = vsel %vm35, %v27, 0
    %v40 = vsel %vm35, %v28, 0
    %42 = vmatpush.msra.mxu0 0.0
    %43 = vmatpush.msra.mxu0 0.0
    %44 = vmatpush.msra.mxu0 0.0
    %45 = vmatpush.msra.mxu0 0.0
    %46 = vmatpush.msra.mxu0 0.0
    %47 = vmatpush.msra.mxu0 0.0
    %48 = vmatpush.msra.mxu0 0.0
    %49 = vmatpush.msra.mxu0 0.0
    %50 = vmatpush.msra.mxu0 0.0
    %51 = vmatpush.msra.mxu0 0.0
    %52 = vmatpush.msra.mxu0 0.0
    %53 = vmatpush.msra.mxu0 0.0
    %54 = vmatpush.msra.mxu0 0.0
    %55 = vmatpush.msra.mxu0 0.0
    %v56 = vand.u32 %v30, 4294901760
    %57 = vmatpush.msra.mxu0 %v56
    %v58 = vand.u32 %v29, 4294901760
    %59 = vmatpush.msra.mxu0 %v58
    %v60 = vand.u32 %v37, 4294901760
    %v61 = vsub.f32 %v37, %v60
    %v62 = vand.u32 %v61, 4294901760
    %v63 = vsub.f32 %v61, %v62
    %v64 = vand.u32 %v63, 4294901760
    %65 = vmatmul.f32.gmra.mxu0 %v64
    %v66 = vpop.f32.mrf.mxu0
    %v67 = vadd.f32 %v33, %v66
    %v68 = vand.u32 %v40, 4294901760
    %v69 = vsub.f32 %v40, %v68
    %v70 = vand.u32 %v69, 4294901760
    %v71 = vsub.f32 %v69, %v70
    %v72 = vand.u32 %v71, 4294901760
    %73 = vmatmul.f32.gmra.mxu0 %v72
    %v74 = vpop.f32.mrf.mxu0
    %v75 = vadd.f32 %v33, %v74
    %76 = vdwg.mxu0
    %77 = vmatpush.msra.mxu0 0.0
    %78 = vmatpush.msra.mxu0 0.0
    %79 = vmatpush.msra.mxu0 0.0
    %80 = vmatpush.msra.mxu0 0.0
    %81 = vmatpush.msra.mxu0 0.0
    %82 = vmatpush.msra.mxu0 0.0
    %83 = vmatpush.msra.mxu0 0.0
    %84 = vmatpush.msra.mxu0 0.0
    %85 = vmatpush.msra.mxu0 0.0
    %86 = vmatpush.msra.mxu0 0.0
    %87 = vmatpush.msra.mxu0 0.0
    %88 = vmatpush.msra.mxu0 0.0
    %89 = vmatpush.msra.mxu0 0.0
    %90 = vmatpush.msra.mxu0 0.0
    %v91 = vand.u32 %v30, 4294901760
    %v92 = vsub.f32 %v30, %v91
    %v93 = vand.u32 %v92, 4294901760
    %v94 = vsub.f32 %v92, %v93
    %v95 = vand.u32 %v94, 4294901760
    %96 = vmatpush.msra.mxu0 %v95
    %v97 = vand.u32 %v29, 4294901760
    %v98 = vsub.f32 %v29, %v97
    %v99 = vand.u32 %v98, 4294901760
    %v100 = vsub.f32 %v98, %v99
    %v101 = vand.u32 %v100, 4294901760
    %102 = vmatpush.msra.mxu0 %v101
    %v103 = vand.u32 %v37, 4294901760
    %104 = vmatmul.f32.gmra.mxu0 %v103
    %v105 = vpop.f32.mrf.mxu0
    %v106 = vadd.f32 %v67, %v105
    %v107 = vand.u32 %v40, 4294901760
    %108 = vmatmul.f32.gmra.mxu0 %v107
    %v109 = vpop.f32.mrf.mxu0
    %v110 = vadd.f32 %v75, %v109
    %111 = vdwg.mxu0
    %112 = vmatpush.msra.mxu0 0.0
    %113 = vmatpush.msra.mxu0 0.0
    %114 = vmatpush.msra.mxu0 0.0
    %115 = vmatpush.msra.mxu0 0.0
    %116 = vmatpush.msra.mxu0 0.0
    %117 = vmatpush.msra.mxu0 0.0
    %118 = vmatpush.msra.mxu0 0.0
    %119 = vmatpush.msra.mxu0 0.0
    %120 = vmatpush.msra.mxu0 0.0
    %121 = vmatpush.msra.mxu0 0.0
    %122 = vmatpush.msra.mxu0 0.0
    %123 = vmatpush.msra.mxu0 0.0
    %124 = vmatpush.msra.mxu0 0.0
    %125 = vmatpush.msra.mxu0 0.0
    %v126 = vand.u32 %v30, 4294901760
    %v127 = vsub.f32 %v30, %v126
    %128 = vmatpush.msra.mxu0 %v127
    %v129 = vand.u32 %v29, 4294901760
    %v130 = vsub.f32 %v29, %v129
    %131 = vmatpush.msra.mxu0 %v130
    %v132 = vand.u32 %v37, 4294901760
    %v133 = vsub.f32 %v37, %v132
    %134 = vmatmul.f32.gmra.mxu0 %v133
    %v135 = vpop.f32.mrf.mxu0
    %v136 = vadd.f32 %v106, %v135
    %v137 = vand.u32 %v40, 4294901760
    %v138 = vsub.f32 %v40, %v137
    %139 = vmatmul.f32.gmra.mxu0 %v138
    %v140 = vpop.f32.mrf.mxu0
    %v141 = vadd.f32 %v110, %v140
    %142 = vdwg.mxu0
    %143 = vmatpush.msra.mxu0 0.0
    %144 = vmatpush.msra.mxu0 0.0
    %145 = vmatpush.msra.mxu0 0.0
    %146 = vmatpush.msra.mxu0 0.0
    %147 = vmatpush.msra.mxu0 0.0
    %148 = vmatpush.msra.mxu0 0.0
    %149 = vmatpush.msra.mxu0 0.0
    %150 = vmatpush.msra.mxu0 0.0
    %151 = vmatpush.msra.mxu0 0.0
    %152 = vmatpush.msra.mxu0 0.0
    %153 = vmatpush.msra.mxu0 0.0
    %154 = vmatpush.msra.mxu0 0.0
    %155 = vmatpush.msra.mxu0 0.0
    %156 = vmatpush.msra.mxu0 0.0
    %v157 = vand.u32 %v30, 4294901760
    %158 = vmatpush.msra.mxu0 %v157
    %v159 = vand.u32 %v29, 4294901760
    %160 = vmatpush.msra.mxu0 %v159
    %v161 = vand.u32 %v37, 4294901760
    %v162 = vsub.f32 %v37, %v161
    %v163 = vand.u32 %v162, 4294901760
    %164 = vmatmul.f32.gmra.mxu0 %v163
    %v165 = vpop.f32.mrf.mxu0
    %v166 = vadd.f32 %v136, %v165
    %v167 = vand.u32 %v40, 4294901760
    %v168 = vsub.f32 %v40, %v167
    %v169 = vand.u32 %v168, 4294901760
    %170 = vmatmul.f32.gmra.mxu0 %v169
    %v171 = vpop.f32.mrf.mxu0
    %v172 = vadd.f32 %v141, %v171
    %173 = vdwg.mxu0
    %174 = vmatpush.msra.mxu0 0.0
    %175 = vmatpush.msra.mxu0 0.0
    %176 = vmatpush.msra.mxu0 0.0
    %177 = vmatpush.msra.mxu0 0.0
    %178 = vmatpush.msra.mxu0 0.0
    %179 = vmatpush.msra.mxu0 0.0
    %180 = vmatpush.msra.mxu0 0.0
    %181 = vmatpush.msra.mxu0 0.0
    %182 = vmatpush.msra.mxu0 0.0
    %183 = vmatpush.msra.mxu0 0.0
    %184 = vmatpush.msra.mxu0 0.0
    %185 = vmatpush.msra.mxu0 0.0
    %186 = vmatpush.msra.mxu0 0.0
    %187 = vmatpush.msra.mxu0 0.0
    %v188 = vand.u32 %v30, 4294901760
    %v189 = vsub.f32 %v30, %v188
    %v190 = vand.u32 %v189, 4294901760
    %191 = vmatpush.msra.mxu0 %v190
    %v192 = vand.u32 %v29, 4294901760
    %v193 = vsub.f32 %v29, %v192
    %v194 = vand.u32 %v193, 4294901760
    %195 = vmatpush.msra.mxu0 %v194
    %v196 = vand.u32 %v37, 4294901760
    %197 = vmatmul.f32.gmra.mxu0 %v196
    %v198 = vpop.f32.mrf.mxu0
    %v199 = vadd.f32 %v166, %v198
    %v200 = vand.u32 %v40, 4294901760
    %201 = vmatmul.f32.gmra.mxu0 %v200
    %v202 = vpop.f32.mrf.mxu0
    %v203 = vadd.f32 %v172, %v202
    %204 = vdwg.mxu0
    %205 = vmatpush.msra.mxu0 0.0
    %206 = vmatpush.msra.mxu0 0.0
    %207 = vmatpush.msra.mxu0 0.0
    %208 = vmatpush.msra.mxu0 0.0
    %209 = vmatpush.msra.mxu0 0.0
    %210 = vmatpush.msra.mxu0 0.0
    %211 = vmatpush.msra.mxu0 0.0
    %212 = vmatpush.msra.mxu0 0.0
    %213 = vmatpush.msra.mxu0 0.0
    %214 = vmatpush.msra.mxu0 0.0
    %215 = vmatpush.msra.mxu0 0.0
    %216 = vmatpush.msra.mxu0 0.0
    %217 = vmatpush.msra.mxu0 0.0
    %218 = vmatpush.msra.mxu0 0.0
    %v219 = vand.u32 %v30, 4294901760
    %220 = vmatpush.msra.mxu0 %v219
    %v221 = vand.u32 %v29, 4294901760
    %222 = vmatpush.msra.mxu0 %v221
    %v223 = vand.u32 %v37, 4294901760
    %224 = vmatmul.f32.gmra.mxu0 %v223
    %v225 = vpop.f32.mrf.mxu0
    %v226 = vadd.f32 %v199, %v225
    %v227 = vand.u32 %v40, 4294901760
    %228 = vmatmul.f32.gmra.mxu0 %v227
    %v229 = vpop.f32.mrf.mxu0
    %v230 = vadd.f32 %v203, %v229
    %231 = vdwg.mxu0
    %v232 = vld [vmem:[%s2] sm:$0xff]
    %v233 = vld [vmem:[%s2 + $0x8] sm:$0xff]
    %v234 = vld [vmem:[%s2 + $0x10] sm:$0xff]
    %v235 = vld [vmem:[%s2 + $0x18] sm:$0xff]
    %v236 = vld [vmem:[%s4] sm:$0x1]
    %v238 = vperm.slane %v236, 0
    %vm239 = vcmask 261120
    %v241 = vsel %vm239, 0.0, 0
    %243 = vmatpush.msra.mxu0 0.0
    %244 = vmatpush.msra.mxu0 0.0
    %245 = vmatpush.msra.mxu0 0.0
    %246 = vmatpush.msra.mxu0 0.0
    %247 = vmatpush.msra.mxu0 0.0
    %248 = vmatpush.msra.mxu0 0.0
    %249 = vmatpush.msra.mxu0 0.0
    %250 = vmatpush.msra.mxu0 0.0
    %251 = vmatpush.msra.mxu0 0.0
    %252 = vmatpush.msra.mxu0 0.0
    %253 = vmatpush.msra.mxu0 0.0
    %254 = vmatpush.msra.mxu0 0.0
    %v255 = vand.u32 %v235, 4294901760
    %256 = vmatpush.msra.mxu0 %v255
    %v257 = vand.u32 %v234, 4294901760
    %258 = vmatpush.msra.mxu0 %v257
    %v259 = vand.u32 %v233, 4294901760
    %260 = vmatpush.msra.mxu0 %v259
    %v261 = vand.u32 %v232, 4294901760
    %262 = vmatpush.msra.mxu0 %v261
    %v263 = vand.u32 %v241, 4294901760
    %v264 = vsub.f32 %v241, %v263
    %v265 = vand.u32 %v264, 4294901760
    %v266 = vsub.f32 %v264, %v265
    %v267 = vand.u32 %v266, 4294901760
    %268 = vmatmul.f32.gmra.mxu0 %v267
    %v269 = vpop.f32.mrf.mxu0
    %v270 = vadd.f32 0.0, %v269
    %271 = vdwg.mxu0
    %272 = vmatpush.msra.mxu0 0.0
    %273 = vmatpush.msra.mxu0 0.0
    %274 = vmatpush.msra.mxu0 0.0
    %275 = vmatpush.msra.mxu0 0.0
    %276 = vmatpush.msra.mxu0 0.0
    %277 = vmatpush.msra.mxu0 0.0
    %278 = vmatpush.msra.mxu0 0.0
    %279 = vmatpush.msra.mxu0 0.0
    %280 = vmatpush.msra.mxu0 0.0
    %281 = vmatpush.msra.mxu0 0.0
    %282 = vmatpush.msra.mxu0 0.0
    %283 = vmatpush.msra.mxu0 0.0
    %v284 = vand.u32 %v235, 4294901760
    %v285 = vsub.f32 %v235, %v284
    %v286 = vand.u32 %v285, 4294901760
    %v287 = vsub.f32 %v285, %v286
    %v288 = vand.u32 %v287, 4294901760
    %289 = vmatpush.msra.mxu0 %v288
    %v290 = vand.u32 %v234, 4294901760
    %v291 = vsub.f32 %v234, %v290
    %v292 = vand.u32 %v291, 4294901760
    %v293 = vsub.f32 %v291, %v292
    %v294 = vand.u32 %v293, 4294901760
    %295 = vmatpush.msra.mxu0 %v294
    %v296 = vand.u32 %v233, 4294901760
    %v297 = vsub.f32 %v233, %v296
    %v298 = vand.u32 %v297, 4294901760
    %v299 = vsub.f32 %v297, %v298
    %v300 = vand.u32 %v299, 4294901760
    %301 = vmatpush.msra.mxu0 %v300
    %v302 = vand.u32 %v232, 4294901760
    %v303 = vsub.f32 %v232, %v302
    %v304 = vand.u32 %v303, 4294901760
    %v305 = vsub.f32 %v303, %v304
    %v306 = vand.u32 %v305, 4294901760
    %307 = vmatpush.msra.mxu0 %v306
    %v308 = vand.u32 %v241, 4294901760
    %309 = vmatmul.f32.gmra.mxu0 %v308
    %v310 = vpop.f32.mrf.mxu0
    %v311 = vadd.f32 %v270, %v310
    %312 = vdwg.mxu0
    %313 = vmatpush.msra.mxu0 0.0
    %314 = vmatpush.msra.mxu0 0.0
    %315 = vmatpush.msra.mxu0 0.0
    %316 = vmatpush.msra.mxu0 0.0
    %317 = vmatpush.msra.mxu0 0.0
    %318 = vmatpush.msra.mxu0 0.0
    %319 = vmatpush.msra.mxu0 0.0
    %320 = vmatpush.msra.mxu0 0.0
    %321 = vmatpush.msra.mxu0 0.0
    %322 = vmatpush.msra.mxu0 0.0
    %323 = vmatpush.msra.mxu0 0.0
    %324 = vmatpush.msra.mxu0 0.0
    %v325 = vand.u32 %v235, 4294901760
    %v326 = vsub.f32 %v235, %v325
    %327 = vmatpush.msra.mxu0 %v326
    %v328 = vand.u32 %v234, 4294901760
    %v329 = vsub.f32 %v234, %v328
    %330 = vmatpush.msra.mxu0 %v329
    %v331 = vand.u32 %v233, 4294901760
    %v332 = vsub.f32 %v233, %v331
    %333 = vmatpush.msra.mxu0 %v332
    %v334 = vand.u32 %v232, 4294901760
    %v335 = vsub.f32 %v232, %v334
    %336 = vmatpush.msra.mxu0 %v335
    %v337 = vand.u32 %v241, 4294901760
    %v338 = vsub.f32 %v241, %v337
    %339 = vmatmul.f32.gmra.mxu0 %v338
    %v340 = vpop.f32.mrf.mxu0
    %v341 = vadd.f32 %v311, %v340
    %342 = vdwg.mxu0
    %343 = vmatpush.msra.mxu0 0.0
    %344 = vmatpush.msra.mxu0 0.0
    %345 = vmatpush.msra.mxu0 0.0
    %346 = vmatpush.msra.mxu0 0.0
    %347 = vmatpush.msra.mxu0 0.0
    %348 = vmatpush.msra.mxu0 0.0
    %349 = vmatpush.msra.mxu0 0.0
    %350 = vmatpush.msra.mxu0 0.0
    %351 = vmatpush.msra.mxu0 0.0
    %352 = vmatpush.msra.mxu0 0.0
    %353 = vmatpush.msra.mxu0 0.0
    %354 = vmatpush.msra.mxu0 0.0
    %v355 = vand.u32 %v235, 4294901760
    %356 = vmatpush.msra.mxu0 %v355
    %v357 = vand.u32 %v234, 4294901760
    %358 = vmatpush.msra.mxu0 %v357
    %v359 = vand.u32 %v233, 4294901760
    %360 = vmatpush.msra.mxu0 %v359
    %v361 = vand.u32 %v232, 4294901760
    %362 = vmatpush.msra.mxu0 %v361
    %v363 = vand.u32 %v241, 4294901760
    %v364 = vsub.f32 %v241, %v363
    %v365 = vand.u32 %v364, 4294901760
    %366 = vmatmul.f32.gmra.mxu0 %v365
    %v367 = vpop.f32.mrf.mxu0
    %v368 = vadd.f32 %v341, %v367
    %369 = vdwg.mxu0
    %370 = vmatpush.msra.mxu0 0.0
    %371 = vmatpush.msra.mxu0 0.0
    %372 = vmatpush.msra.mxu0 0.0
    %373 = vmatpush.msra.mxu0 0.0
    %374 = vmatpush.msra.mxu0 0.0
    %375 = vmatpush.msra.mxu0 0.0
    %376 = vmatpush.msra.mxu0 0.0
    %377 = vmatpush.msra.mxu0 0.0
    %378 = vmatpush.msra.mxu0 0.0
    %379 = vmatpush.msra.mxu0 0.0
    %380 = vmatpush.msra.mxu0 0.0
    %381 = vmatpush.msra.mxu0 0.0
    %v382 = vand.u32 %v235, 4294901760
    %v383 = vsub.f32 %v235, %v382
    %v384 = vand.u32 %v383, 4294901760
    %385 = vmatpush.msra.mxu0 %v384
    %v386 = vand.u32 %v234, 4294901760
    %v387 = vsub.f32 %v234, %v386
    %v388 = vand.u32 %v387, 4294901760
    %389 = vmatpush.msra.mxu0 %v388
    %v390 = vand.u32 %v233, 4294901760
    %v391 = vsub.f32 %v233, %v390
    %v392 = vand.u32 %v391, 4294901760
    %393 = vmatpush.msra.mxu0 %v392
    %v394 = vand.u32 %v232, 4294901760
    %v395 = vsub.f32 %v232, %v394
    %v396 = vand.u32 %v395, 4294901760
    %397 = vmatpush.msra.mxu0 %v396
    %v398 = vand.u32 %v241, 4294901760
    %399 = vmatmul.f32.gmra.mxu0 %v398
    %v400 = vpop.f32.mrf.mxu0
    %v401 = vadd.f32 %v368, %v400
    %402 = vdwg.mxu0
    %403 = vmatpush.msra.mxu0 0.0
    %404 = vmatpush.msra.mxu0 0.0
    %405 = vmatpush.msra.mxu0 0.0
    %406 = vmatpush.msra.mxu0 0.0
    %407 = vmatpush.msra.mxu0 0.0
    %408 = vmatpush.msra.mxu0 0.0
    %409 = vmatpush.msra.mxu0 0.0
    %410 = vmatpush.msra.mxu0 0.0
    %411 = vmatpush.msra.mxu0 0.0
    %412 = vmatpush.msra.mxu0 0.0
    %413 = vmatpush.msra.mxu0 0.0
    %414 = vmatpush.msra.mxu0 0.0
    %v415 = vand.u32 %v235, 4294901760
    %416 = vmatpush.msra.mxu0 %v415
    %v417 = vand.u32 %v234, 4294901760
    %418 = vmatpush.msra.mxu0 %v417
    %v419 = vand.u32 %v233, 4294901760
    %420 = vmatpush.msra.mxu0 %v419
    %v421 = vand.u32 %v232, 4294901760
    %422 = vmatpush.msra.mxu0 %v421
    %v423 = vand.u32 %v241, 4294901760
    %424 = vmatmul.f32.gmra.mxu0 %v423
    %v425 = vpop.f32.mrf.mxu0
    %v426 = vadd.f32 %v401, %v425
    %427 = vdwg.mxu0
    %v428 = vadd.f32 %v226, %v426
    %v429 = vxor.u32 %v428, 2147483648
    %v430 = vmul.f32 %v429, 1.442695
    %v431 = vpow.pop %v430
    %v432 = vadd.f32 %v431, 1.0
    %v433 = vrcp.pop %v432
    %v434 = vmul.f32 %v432, %v433
    %v435 = vsub.f32 1.0, %v434
    %v436 = vmul.f32 %v433, %v435
    %v437 = vadd.f32 %v433, %v436
    %vm438 = vweird.f32 %v432
    %vm439 = vweird.f32 %v433
    %vm440 = vmor %vm438, %vm439
    %v441 = vsel %vm440, %v433, %v437
    %v442 = vand.u32 2147483647, %v432
    %vm443 = vcmp.eq.f32.partialorder %v442, 8.507059e+37
    %v444 = vand.u32 %v432, 2147483648
    %v445 = vor.u32 1.1754944e-38, %v444
    %v446 = vsel %vm443, %v445, %v441
    %v447 = vmul.f32 1.0, %v446
    %448 = vrot.lane.b32.xlu0 %v238, 64
    %v449 = vpop.permute.xlu0 %448
    %v451 = vadd.f32 %v426, %v449
    %453 = vrot.lane.b32.xlu0 %v451, 64
    %v454 = vpop.permute.xlu0 %453
    %v456 = vmul.f32 %v447, %v454
    %458 = vrot.lane.b32.xlu0 %v456, 64
    %v459 = vpop.permute.xlu0 %458
    %v461 = vadd.f32 %v226, %v459
    %v462 = vtanh.pop %v461
    %464 = vrot.lane.b32.xlu0 %v462, 96
    %v465 = vpop.permute.xlu0 %464
    %v467 = vmul.f32 %v447, %v465
    %v468 = vadd.f32 %v467, 0.0
    %470 = vrot.lane.b32.xlu0 %v468, 96
    %v471 = vpop.permute.xlu0 %470
    %v472 = vsel %vm239, %v471, 0
    %474 = vmatpush.msra.mxu0 0.0
    %475 = vmatpush.msra.mxu0 0.0
    %476 = vmatpush.msra.mxu0 0.0
    %477 = vmatpush.msra.mxu0 0.0
    %478 = vmatpush.msra.mxu0 0.0
    %479 = vmatpush.msra.mxu0 0.0
    %480 = vmatpush.msra.mxu0 0.0
    %481 = vmatpush.msra.mxu0 0.0
    %482 = vmatpush.msra.mxu0 0.0
    %483 = vmatpush.msra.mxu0 0.0
    %484 = vmatpush.msra.mxu0 0.0
    %485 = vmatpush.msra.mxu0 0.0
    %v486 = vand.u32 %v235, 4294901760
    %487 = vmatpush.msra.mxu0 %v486
    %v488 = vand.u32 %v234, 4294901760
    %489 = vmatpush.msra.mxu0 %v488
    %v490 = vand.u32 %v233, 4294901760
    %491 = vmatpush.msra.mxu0 %v490
    %v492 = vand.u32 %v232, 4294901760
    %493 = vmatpush.msra.mxu0 %v492
    %v494 = vand.u32 %v472, 4294901760
    %v495 = vsub.f32 %v472, %v494
    %v496 = vand.u32 %v495, 4294901760
    %v497 = vsub.f32 %v495, %v496
    %v498 = vand.u32 %v497, 4294901760
    %499 = vmatmul.f32.gmra.mxu0 %v498
    %v500 = vpop.f32.mrf.mxu0
    %v501 = vadd.f32 0.0, %v500
    %502 = vdwg.mxu0
    %503 = vmatpush.msra.mxu0 0.0
    %504 = vmatpush.msra.mxu0 0.0
    %505 = vmatpush.msra.mxu0 0.0
    %506 = vmatpush.msra.mxu0 0.0
    %507 = vmatpush.msra.mxu0 0.0
    %508 = vmatpush.msra.mxu0 0.0
    %509 = vmatpush.msra.mxu0 0.0
    %510 = vmatpush.msra.mxu0 0.0
    %511 = vmatpush.msra.mxu0 0.0
    %512 = vmatpush.msra.mxu0 0.0
    %513 = vmatpush.msra.mxu0 0.0
    %514 = vmatpush.msra.mxu0 0.0
    %v515 = vand.u32 %v235, 4294901760
    %v516 = vsub.f32 %v235, %v515
    %v517 = vand.u32 %v516, 4294901760
    %v518 = vsub.f32 %v516, %v517
    %v519 = vand.u32 %v518, 4294901760
    %520 = vmatpush.msra.mxu0 %v519
    %v521 = vand.u32 %v234, 4294901760
    %v522 = vsub.f32 %v234, %v521
    %v523 = vand.u32 %v522, 4294901760
    %v524 = vsub.f32 %v522, %v523
    %v525 = vand.u32 %v524, 4294901760
    %526 = vmatpush.msra.mxu0 %v525
    %v527 = vand.u32 %v233, 4294901760
    %v528 = vsub.f32 %v233, %v527
    %v529 = vand.u32 %v528, 4294901760
    %v530 = vsub.f32 %v528, %v529
    %v531 = vand.u32 %v530, 4294901760
    %532 = vmatpush.msra.mxu0 %v531
    %v533 = vand.u32 %v232, 4294901760
    %v534 = vsub.f32 %v232, %v533
    %v535 = vand.u32 %v534, 4294901760
    %v536 = vsub.f32 %v534, %v535
    %v537 = vand.u32 %v536, 4294901760
    %538 = vmatpush.msra.mxu0 %v537
    %v539 = vand.u32 %v472, 4294901760
    %540 = vmatmul.f32.gmra.mxu0 %v539
    %v541 = vpop.f32.mrf.mxu0
    %v542 = vadd.f32 %v501, %v541
    %543 = vdwg.mxu0
    %544 = vmatpush.msra.mxu0 0.0
    %545 = vmatpush.msra.mxu0 0.0
    %546 = vmatpush.msra.mxu0 0.0
    %547 = vmatpush.msra.mxu0 0.0
    %548 = vmatpush.msra.mxu0 0.0
    %549 = vmatpush.msra.mxu0 0.0
    %550 = vmatpush.msra.mxu0 0.0
    %551 = vmatpush.msra.mxu0 0.0
    %552 = vmatpush.msra.mxu0 0.0
    %553 = vmatpush.msra.mxu0 0.0
    %554 = vmatpush.msra.mxu0 0.0
    %555 = vmatpush.msra.mxu0 0.0
    %v556 = vand.u32 %v235, 4294901760
    %v557 = vsub.f32 %v235, %v556
    %558 = vmatpush.msra.mxu0 %v557
    %v559 = vand.u32 %v234, 4294901760
    %v560 = vsub.f32 %v234, %v559
    %561 = vmatpush.msra.mxu0 %v560
    %v562 = vand.u32 %v233, 4294901760
    %v563 = vsub.f32 %v233, %v562
    %564 = vmatpush.msra.mxu0 %v563
    %v565 = vand.u32 %v232, 4294901760
    %v566 = vsub.f32 %v232, %v565
    %567 = vmatpush.msra.mxu0 %v566
    %v568 = vand.u32 %v472, 4294901760
    %v569 = vsub.f32 %v472, %v568
    %570 = vmatmul.f32.gmra.mxu0 %v569
    %v571 = vpop.f32.mrf.mxu0
    %v572 = vadd.f32 %v542, %v571
    %573 = vdwg.mxu0
    %574 = vmatpush.msra.mxu0 0.0
    %575 = vmatpush.msra.mxu0 0.0
    %576 = vmatpush.msra.mxu0 0.0
    %577 = vmatpush.msra.mxu0 0.0
    %578 = vmatpush.msra.mxu0 0.0
    %579 = vmatpush.msra.mxu0 0.0
    %580 = vmatpush.msra.mxu0 0.0
    %581 = vmatpush.msra.mxu0 0.0
    %582 = vmatpush.msra.mxu0 0.0
    %583 = vmatpush.msra.mxu0 0.0
    %584 = vmatpush.msra.mxu0 0.0
    %585 = vmatpush.msra.mxu0 0.0
    %v586 = vand.u32 %v235, 4294901760
    %587 = vmatpush.msra.mxu0 %v586
    %v588 = vand.u32 %v234, 4294901760
    %589 = vmatpush.msra.mxu0 %v588
    %v590 = vand.u32 %v233, 4294901760
    %591 = vmatpush.msra.mxu0 %v590
    %v592 = vand.u32 %v232, 4294901760
    %593 = vmatpush.msra.mxu0 %v592
    %v594 = vand.u32 %v472, 4294901760
    %v595 = vsub.f32 %v472, %v594
    %v596 = vand.u32 %v595, 4294901760
    %597 = vmatmul.f32.gmra.mxu0 %v596
    %v598 = vpop.f32.mrf.mxu0
    %v599 = vadd.f32 %v572, %v598
    %600 = vdwg.mxu0
    %601 = vmatpush.msra.mxu0 0.0
    %602 = vmatpush.msra.mxu0 0.0
    %603 = vmatpush.msra.mxu0 0.0
    %604 = vmatpush.msra.mxu0 0.0
    %605 = vmatpush.msra.mxu0 0.0
    %606 = vmatpush.msra.mxu0 0.0
    %607 = vmatpush.msra.mxu0 0.0
    %608 = vmatpush.msra.mxu0 0.0
    %609 = vmatpush.msra.mxu0 0.0
    %610 = vmatpush.msra.mxu0 0.0
    %611 = vmatpush.msra.mxu0 0.0
    %612 = vmatpush.msra.mxu0 0.0
    %v613 = vand.u32 %v235, 4294901760
    %v614 = vsub.f32 %v235, %v613
    %v615 = vand.u32 %v614, 4294901760
    %616 = vmatpush.msra.mxu0 %v615
    %v617 = vand.u32 %v234, 4294901760
    %v618 = vsub.f32 %v234, %v617
    %v619 = vand.u32 %v618, 4294901760
    %620 = vmatpush.msra.mxu0 %v619
    %v621 = vand.u32 %v233, 4294901760
    %v622 = vsub.f32 %v233, %v621
    %v623 = vand.u32 %v622, 4294901760
    %624 = vmatpush.msra.mxu0 %v623
    %v625 = vand.u32 %v232, 4294901760
    %v626 = vsub.f32 %v232, %v625
    %v627 = vand.u32 %v626, 4294901760
    %628 = vmatpush.msra.mxu0 %v627
    %v629 = vand.u32 %v472, 4294901760
    %630 = vmatmul.f32.gmra.mxu0 %v629
    %v631 = vpop.f32.mrf.mxu0
    %v632 = vadd.f32 %v599, %v631
    %633 = vdwg.mxu0
    %634 = vmatpush.msra.mxu0 0.0
    %635 = vmatpush.msra.mxu0 0.0
    %636 = vmatpush.msra.mxu0 0.0
    %637 = vmatpush.msra.mxu0 0.0
    %638 = vmatpush.msra.mxu0 0.0
    %639 = vmatpush.msra.mxu0 0.0
    %640 = vmatpush.msra.mxu0 0.0
    %641 = vmatpush.msra.mxu0 0.0
    %642 = vmatpush.msra.mxu0 0.0
    %643 = vmatpush.msra.mxu0 0.0
    %644 = vmatpush.msra.mxu0 0.0
    %645 = vmatpush.msra.mxu0 0.0
    %v646 = vand.u32 %v235, 4294901760
    %647 = vmatpush.msra.mxu0 %v646
    %v648 = vand.u32 %v234, 4294901760
    %649 = vmatpush.msra.mxu0 %v648
    %v650 = vand.u32 %v233, 4294901760
    %651 = vmatpush.msra.mxu0 %v650
    %v652 = vand.u32 %v232, 4294901760
    %653 = vmatpush.msra.mxu0 %v652
    %v654 = vand.u32 %v472, 4294901760
    %655 = vmatmul.f32.gmra.mxu0 %v654
    %v656 = vpop.f32.mrf.mxu0
    %v657 = vadd.f32 %v632, %v656
    %658 = vdwg.mxu0
    %v660 = vrot.slane %v657, 6
    %v662 = vadd.f32 %v226, %v660
    %v663 = vxor.u32 %v662, 2147483648
    %v664 = vmul.f32 %v663, 1.442695
    %v665 = vpow.pop %v664
    %v666 = vadd.f32 %v665, 1.0
    %v667 = vrcp.pop %v666
    %v668 = vmul.f32 %v666, %v667
    %v669 = vsub.f32 1.0, %v668
    %v670 = vmul.f32 %v667, %v669
    %v671 = vadd.f32 %v667, %v670
    %vm672 = vweird.f32 %v666
    %vm673 = vweird.f32 %v667
    %vm674 = vmor %vm672, %vm673
    %v675 = vsel %vm674, %v667, %v671
    %v676 = vand.u32 2147483647, %v666
    %vm677 = vcmp.eq.f32.partialorder %v676, 8.507059e+37
    %v678 = vand.u32 %v666, 2147483648
    %v679 = vor.u32 1.1754944e-38, %v678
    %v680 = vsel %vm677, %v679, %v675
    %v681 = vmul.f32 1.0, %v680
    %v682 = vadd.f32 %v657, %v449
    %v684 = vrot.slane %v682, 6
    %685 = vrot.lane.b32.xlu0 %v684, 64
    %v686 = vpop.permute.xlu0 %685
    %v688 = vmul.f32 %v681, %v686
    %690 = vrot.lane.b32.xlu0 %v688, 64
    %v691 = vpop.permute.xlu0 %690
    %v693 = vadd.f32 %v226, %v691
    %v694 = vtanh.pop %v693
    %v695 = vrot.slane %v468, 6
    %696 = vrot.lane.b32.xlu0 %v695, 32
    %v697 = vpop.permute.xlu0 %696
    %v699 = vsub.f32 %v694, %v697
    %701 = vrot.lane.b32.xlu0 %v699, 96
    %v702 = vpop.permute.xlu0 %701
    %v704 = vmul.f32 %v681, %v702
    %v706 = vrot.slane %v704, 2
    %v708 = vadd.f32 %v468, %v706
    %710 = vrot.lane.b32.xlu0 %v708, 96
    %v711 = vpop.permute.xlu0 %710
    %v712 = vsel %vm239, %v711, 0
    %714 = vmatpush.msra.mxu0 0.0
    %715 = vmatpush.msra.mxu0 0.0
    %716 = vmatpush.msra.mxu0 0.0
    %717 = vmatpush.msra.mxu0 0.0
    %718 = vmatpush.msra.mxu0 0.0
    %719 = vmatpush.msra.mxu0 0.0
    %720 = vmatpush.msra.mxu0 0.0
    %721 = vmatpush.msra.mxu0 0.0
    %722 = vmatpush.msra.mxu0 0.0
    %723 = vmatpush.msra.mxu0 0.0
    %724 = vmatpush.msra.mxu0 0.0
    %725 = vmatpush.msra.mxu0 0.0
    %v726 = vand.u32 %v235, 4294901760
    %727 = vmatpush.msra.mxu0 %v726
    %v728 = vand.u32 %v234, 4294901760
    %729 = vmatpush.msra.mxu0 %v728
    %v730 = vand.u32 %v233, 4294901760
    %731 = vmatpush.msra.mxu0 %v730
    %v732 = vand.u32 %v232, 4294901760
    %733 = vmatpush.msra.mxu0 %v732
    %v734 = vand.u32 %v712, 4294901760
    %v735 = vsub.f32 %v712, %v734
    %v736 = vand.u32 %v735, 4294901760
    %v737 = vsub.f32 %v735, %v736
    %v738 = vand.u32 %v737, 4294901760
    %739 = vmatmul.f32.gmra.mxu0 %v738
    %v740 = vpop.f32.mrf.mxu0
    %v741 = vadd.f32 0.0, %v740
    %742 = vdwg.mxu0
    %743 = vmatpush.msra.mxu0 0.0
    %744 = vmatpush.msra.mxu0 0.0
    %745 = vmatpush.msra.mxu0 0.0
    %746 = vmatpush.msra.mxu0 0.0
    %747 = vmatpush.msra.mxu0 0.0
    %748 = vmatpush.msra.mxu0 0.0
    %749 = vmatpush.msra.mxu0 0.0
    %750 = vmatpush.msra.mxu0 0.0
    %751 = vmatpush.msra.mxu0 0.0
    %752 = vmatpush.msra.mxu0 0.0
    %753 = vmatpush.msra.mxu0 0.0
    %754 = vmatpush.msra.mxu0 0.0
    %v755 = vand.u32 %v235, 4294901760
    %v756 = vsub.f32 %v235, %v755
    %v757 = vand.u32 %v756, 4294901760
    %v758 = vsub.f32 %v756, %v757
    %v759 = vand.u32 %v758, 4294901760
    %760 = vmatpush.msra.mxu0 %v759
    %v761 = vand.u32 %v234, 4294901760
    %v762 = vsub.f32 %v234, %v761
    %v763 = vand.u32 %v762, 4294901760
    %v764 = vsub.f32 %v762, %v763
    %v765 = vand.u32 %v764, 4294901760
    %766 = vmatpush.msra.mxu0 %v765
    %v767 = vand.u32 %v233, 4294901760
    %v768 = vsub.f32 %v233, %v767
    %v769 = vand.u32 %v768, 4294901760
    %v770 = vsub.f32 %v768, %v769
    %v771 = vand.u32 %v770, 4294901760
    %772 = vmatpush.msra.mxu0 %v771
    %v773 = vand.u32 %v232, 4294901760
    %v774 = vsub.f32 %v232, %v773
    %v775 = vand.u32 %v774, 4294901760
    %v776 = vsub.f32 %v774, %v775
    %v777 = vand.u32 %v776, 4294901760
    %778 = vmatpush.msra.mxu0 %v777
    %v779 = vand.u32 %v712, 4294901760
    %780 = vmatmul.f32.gmra.mxu0 %v779
    %v781 = vpop.f32.mrf.mxu0
    %v782 = vadd.f32 %v741, %v781
    %783 = vdwg.mxu0
    %784 = vmatpush.msra.mxu0 0.0
    %785 = vmatpush.msra.mxu0 0.0
    %786 = vmatpush.msra.mxu0 0.0
    %787 = vmatpush.msra.mxu0 0.0
    %788 = vmatpush.msra.mxu0 0.0
    %789 = vmatpush.msra.mxu0 0.0
    %790 = vmatpush.msra.mxu0 0.0
    %791 = vmatpush.msra.mxu0 0.0
    %792 = vmatpush.msra.mxu0 0.0
    %793 = vmatpush.msra.mxu0 0.0
    %794 = vmatpush.msra.mxu0 0.0
    %795 = vmatpush.msra.mxu0 0.0
    %v796 = vand.u32 %v235, 4294901760
    %v797 = vsub.f32 %v235, %v796
    %798 = vmatpush.msra.mxu0 %v797
    %v799 = vand.u32 %v234, 4294901760
    %v800 = vsub.f32 %v234, %v799
    %801 = vmatpush.msra.mxu0 %v800
    %v802 = vand.u32 %v233, 4294901760
    %v803 = vsub.f32 %v233, %v802
    %804 = vmatpush.msra.mxu0 %v803
    %v805 = vand.u32 %v232, 4294901760
    %v806 = vsub.f32 %v232, %v805
    %807 = vmatpush.msra.mxu0 %v806
    %v808 = vand.u32 %v712, 4294901760
    %v809 = vsub.f32 %v712, %v808
    %810 = vmatmul.f32.gmra.mxu0 %v809
    %v811 = vpop.f32.mrf.mxu0
    %v812 = vadd.f32 %v782, %v811
    %813 = vdwg.mxu0
    %814 = vmatpush.msra.mxu0 0.0
    %815 = vmatpush.msra.mxu0 0.0
    %816 = vmatpush.msra.mxu0 0.0
    %817 = vmatpush.msra.mxu0 0.0
    %818 = vmatpush.msra.mxu0 0.0
    %819 = vmatpush.msra.mxu0 0.0
    %820 = vmatpush.msra.mxu0 0.0
    %821 = vmatpush.msra.mxu0 0.0
    %822 = vmatpush.msra.mxu0 0.0
    %823 = vmatpush.msra.mxu0 0.0
    %824 = vmatpush.msra.mxu0 0.0
    %825 = vmatpush.msra.mxu0 0.0
    %v826 = vand.u32 %v235, 4294901760
    %827 = vmatpush.msra.mxu0 %v826
    %v828 = vand.u32 %v234, 4294901760
    %829 = vmatpush.msra.mxu0 %v828
    %v830 = vand.u32 %v233, 4294901760
    %831 = vmatpush.msra.mxu0 %v830
    %v832 = vand.u32 %v232, 4294901760
    %833 = vmatpush.msra.mxu0 %v832
    %v834 = vand.u32 %v712, 4294901760
    %v835 = vsub.f32 %v712, %v834
    %v836 = vand.u32 %v835, 4294901760
    %837 = vmatmul.f32.gmra.mxu0 %v836
    %v838 = vpop.f32.mrf.mxu0
    %v839 = vadd.f32 %v812, %v838
    %840 = vdwg.mxu0
    %841 = vmatpush.msra.mxu0 0.0
    %842 = vmatpush.msra.mxu0 0.0
    %843 = vmatpush.msra.mxu0 0.0
    %844 = vmatpush.msra.mxu0 0.0
    %845 = vmatpush.msra.mxu0 0.0
    %846 = vmatpush.msra.mxu0 0.0
    %847 = vmatpush.msra.mxu0 0.0
    %848 = vmatpush.msra.mxu0 0.0
    %849 = vmatpush.msra.mxu0 0.0
    %850 = vmatpush.msra.mxu0 0.0
    %851 = vmatpush.msra.mxu0 0.0
    %852 = vmatpush.msra.mxu0 0.0
    %v853 = vand.u32 %v235, 4294901760
    %v854 = vsub.f32 %v235, %v853
    %v855 = vand.u32 %v854, 4294901760
    %856 = vmatpush.msra.mxu0 %v855
    %v857 = vand.u32 %v234, 4294901760
    %v858 = vsub.f32 %v234, %v857
    %v859 = vand.u32 %v858, 4294901760
    %860 = vmatpush.msra.mxu0 %v859
    %v861 = vand.u32 %v233, 4294901760
    %v862 = vsub.f32 %v233, %v861
    %v863 = vand.u32 %v862, 4294901760
    %864 = vmatpush.msra.mxu0 %v863
    %v865 = vand.u32 %v232, 4294901760
    %v866 = vsub.f32 %v232, %v865
    %v867 = vand.u32 %v866, 4294901760
    %868 = vmatpush.msra.mxu0 %v867
    %v869 = vand.u32 %v712, 4294901760
    %870 = vmatmul.f32.gmra.mxu0 %v869
    %v871 = vpop.f32.mrf.mxu0
    %v872 = vadd.f32 %v839, %v871
    %873 = vdwg.mxu0
    %874 = vmatpush.msra.mxu0 0.0
    %875 = vmatpush.msra.mxu0 0.0
    %876 = vmatpush.msra.mxu0 0.0
    %877 = vmatpush.msra.mxu0 0.0
    %878 = vmatpush.msra.mxu0 0.0
    %879 = vmatpush.msra.mxu0 0.0
    %880 = vmatpush.msra.mxu0 0.0
    %881 = vmatpush.msra.mxu0 0.0
    %882 = vmatpush.msra.mxu0 0.0
    %883 = vmatpush.msra.mxu0 0.0
    %884 = vmatpush.msra.mxu0 0.0
    %885 = vmatpush.msra.mxu0 0.0
    %v886 = vand.u32 %v235, 4294901760
    %887 = vmatpush.msra.mxu0 %v886
    %v888 = vand.u32 %v234, 4294901760
    %889 = vmatpush.msra.mxu0 %v888
    %v890 = vand.u32 %v233, 4294901760
    %891 = vmatpush.msra.mxu0 %v890
    %v892 = vand.u32 %v232, 4294901760
    %893 = vmatpush.msra.mxu0 %v892
    %v894 = vand.u32 %v712, 4294901760
    %895 = vmatmul.f32.gmra.mxu0 %v894
    %v896 = vpop.f32.mrf.mxu0
    %v897 = vadd.f32 %v872, %v896
    %898 = vdwg.mxu0
    %v900 = vrot.slane %v897, 4
    %v902 = vadd.f32 %v226, %v900
    %v903 = vxor.u32 %v902, 2147483648
    %v904 = vmul.f32 %v903, 1.442695
    %v905 = vpow.pop %v904
    %v906 = vadd.f32 %v905, 1.0
    %v907 = vrcp.pop %v906
    %v908 = vmul.f32 %v906, %v907
    %v909 = vsub.f32 1.0, %v908
    %v910 = vmul.f32 %v907, %v909
    %v911 = vadd.f32 %v907, %v910
    %vm912 = vweird.f32 %v906
    %vm913 = vweird.f32 %v907
    %vm914 = vmor %vm912, %vm913
    %v915 = vsel %vm914, %v907, %v911
    %v916 = vand.u32 2147483647, %v906
    %vm917 = vcmp.eq.f32.partialorder %v916, 8.507059e+37
    %v918 = vand.u32 %v906, 2147483648
    %v919 = vor.u32 1.1754944e-38, %v918
    %v920 = vsel %vm917, %v919, %v915
    %v921 = vmul.f32 1.0, %v920
    %v922 = vadd.f32 %v897, %v449
    %v924 = vrot.slane %v922, 4
    %925 = vrot.lane.b32.xlu0 %v924, 64
    %v926 = vpop.permute.xlu0 %925
    %v928 = vmul.f32 %v921, %v926
    %930 = vrot.lane.b32.xlu0 %v928, 64
    %v931 = vpop.permute.xlu0 %930
    %v933 = vadd.f32 %v226, %v931
    %v934 = vtanh.pop %v933
    %v935 = vrot.slane %v708, 4
    %936 = vrot.lane.b32.xlu0 %v935, 32
    %v937 = vpop.permute.xlu0 %936
    %v939 = vsub.f32 %v934, %v937
    %941 = vrot.lane.b32.xlu0 %v939, 96
    %v942 = vpop.permute.xlu0 %941
    %v944 = vmul.f32 %v921, %v942
    %v946 = vrot.slane %v944, 4
    %v948 = vadd.f32 %v708, %v946
    %950 = vrot.lane.b32.xlu0 %v948, 96
    %v951 = vpop.permute.xlu0 %950
    %v952 = vsel %vm239, %v951, 0
    %954 = vmatpush.msra.mxu0 0.0
    %955 = vmatpush.msra.mxu0 0.0
    %956 = vmatpush.msra.mxu0 0.0
    %957 = vmatpush.msra.mxu0 0.0
    %958 = vmatpush.msra.mxu0 0.0
    %959 = vmatpush.msra.mxu0 0.0
    %960 = vmatpush.msra.mxu0 0.0
    %961 = vmatpush.msra.mxu0 0.0
    %962 = vmatpush.msra.mxu0 0.0
    %963 = vmatpush.msra.mxu0 0.0
    %964 = vmatpush.msra.mxu0 0.0
    %965 = vmatpush.msra.mxu0 0.0
    %v966 = vand.u32 %v235, 4294901760
    %967 = vmatpush.msra.mxu0 %v966
    %v968 = vand.u32 %v234, 4294901760
    %969 = vmatpush.msra.mxu0 %v968
    %v970 = vand.u32 %v233, 4294901760
    %971 = vmatpush.msra.mxu0 %v970
    %v972 = vand.u32 %v232, 4294901760
    %973 = vmatpush.msra.mxu0 %v972
    %v974 = vand.u32 %v952, 4294901760
    %v975 = vsub.f32 %v952, %v974
    %v976 = vand.u32 %v975, 4294901760
    %v977 = vsub.f32 %v975, %v976
    %v978 = vand.u32 %v977, 4294901760
    %979 = vmatmul.f32.gmra.mxu0 %v978
    %v980 = vpop.f32.mrf.mxu0
    %v981 = vadd.f32 0.0, %v980
    %982 = vdwg.mxu0
    %983 = vmatpush.msra.mxu0 0.0
    %984 = vmatpush.msra.mxu0 0.0
    %985 = vmatpush.msra.mxu0 0.0
    %986 = vmatpush.msra.mxu0 0.0
    %987 = vmatpush.msra.mxu0 0.0
    %988 = vmatpush.msra.mxu0 0.0
    %989 = vmatpush.msra.mxu0 0.0
    %990 = vmatpush.msra.mxu0 0.0
    %991 = vmatpush.msra.mxu0 0.0
    %992 = vmatpush.msra.mxu0 0.0
    %993 = vmatpush.msra.mxu0 0.0
    %994 = vmatpush.msra.mxu0 0.0
    %v995 = vand.u32 %v235, 4294901760
    %v996 = vsub.f32 %v235, %v995
    %v997 = vand.u32 %v996, 4294901760
    %v998 = vsub.f32 %v996, %v997
    %v999 = vand.u32 %v998, 4294901760
    %1000 = vmatpush.msra.mxu0 %v999
    %v1001 = vand.u32 %v234, 4294901760
    %v1002 = vsub.f32 %v234, %v1001
    %v1003 = vand.u32 %v1002, 4294901760
    %v1004 = vsub.f32 %v1002, %v1003
    %v1005 = vand.u32 %v1004, 4294901760
    %1006 = vmatpush.msra.mxu0 %v1005
    %v1007 = vand.u32 %v233, 4294901760
    %v1008 = vsub.f32 %v233, %v1007
    %v1009 = vand.u32 %v1008, 4294901760
    %v1010 = vsub.f32 %v1008, %v1009
    %v1011 = vand.u32 %v1010, 4294901760
    %1012 = vmatpush.msra.mxu0 %v1011
    %v1013 = vand.u32 %v232, 4294901760
    %v1014 = vsub.f32 %v232, %v1013
    %v1015 = vand.u32 %v1014, 4294901760
    %v1016 = vsub.f32 %v1014, %v1015
    %v1017 = vand.u32 %v1016, 4294901760
    %1018 = vmatpush.msra.mxu0 %v1017
    %v1019 = vand.u32 %v952, 4294901760
    %1020 = vmatmul.f32.gmra.mxu0 %v1019
    %v1021 = vpop.f32.mrf.mxu0
    %v1022 = vadd.f32 %v981, %v1021
    %1023 = vdwg.mxu0
    %1024 = vmatpush.msra.mxu0 0.0
    %1025 = vmatpush.msra.mxu0 0.0
    %1026 = vmatpush.msra.mxu0 0.0
    %1027 = vmatpush.msra.mxu0 0.0
    %1028 = vmatpush.msra.mxu0 0.0
    %1029 = vmatpush.msra.mxu0 0.0
    %1030 = vmatpush.msra.mxu0 0.0
    %1031 = vmatpush.msra.mxu0 0.0
    %1032 = vmatpush.msra.mxu0 0.0
    %1033 = vmatpush.msra.mxu0 0.0
    %1034 = vmatpush.msra.mxu0 0.0
    %1035 = vmatpush.msra.mxu0 0.0
    %v1036 = vand.u32 %v235, 4294901760
    %v1037 = vsub.f32 %v235, %v1036
    %1038 = vmatpush.msra.mxu0 %v1037
    %v1039 = vand.u32 %v234, 4294901760
    %v1040 = vsub.f32 %v234, %v1039
    %1041 = vmatpush.msra.mxu0 %v1040
    %v1042 = vand.u32 %v233, 4294901760
    %v1043 = vsub.f32 %v233, %v1042
    %1044 = vmatpush.msra.mxu0 %v1043
    %v1045 = vand.u32 %v232, 4294901760
    %v1046 = vsub.f32 %v232, %v1045
    %1047 = vmatpush.msra.mxu0 %v1046
    %v1048 = vand.u32 %v952, 4294901760
    %v1049 = vsub.f32 %v952, %v1048
    %1050 = vmatmul.f32.gmra.mxu0 %v1049
    %v1051 = vpop.f32.mrf.mxu0
    %v1052 = vadd.f32 %v1022, %v1051
    %1053 = vdwg.mxu0
    %1054 = vmatpush.msra.mxu0 0.0
    %1055 = vmatpush.msra.mxu0 0.0
    %1056 = vmatpush.msra.mxu0 0.0
    %1057 = vmatpush.msra.mxu0 0.0
    %1058 = vmatpush.msra.mxu0 0.0
    %1059 = vmatpush.msra.mxu0 0.0
    %1060 = vmatpush.msra.mxu0 0.0
    %1061 = vmatpush.msra.mxu0 0.0
    %1062 = vmatpush.msra.mxu0 0.0
    %1063 = vmatpush.msra.mxu0 0.0
    %1064 = vmatpush.msra.mxu0 0.0
    %1065 = vmatpush.msra.mxu0 0.0
    %v1066 = vand.u32 %v235, 4294901760
    %1067 = vmatpush.msra.mxu0 %v1066
    %v1068 = vand.u32 %v234, 4294901760
    %1069 = vmatpush.msra.mxu0 %v1068
    %v1070 = vand.u32 %v233, 4294901760
    %1071 = vmatpush.msra.mxu0 %v1070
    %v1072 = vand.u32 %v232, 4294901760
    %1073 = vmatpush.msra.mxu0 %v1072
    %v1074 = vand.u32 %v952, 4294901760
    %v1075 = vsub.f32 %v952, %v1074
    %v1076 = vand.u32 %v1075, 4294901760
    %1077 = vmatmul.f32.gmra.mxu0 %v1076
    %v1078 = vpop.f32.mrf.mxu0
    %v1079 = vadd.f32 %v1052, %v1078
    %1080 = vdwg.mxu0
    %1081 = vmatpush.msra.mxu0 0.0
    %1082 = vmatpush.msra.mxu0 0.0
    %1083 = vmatpush.msra.mxu0 0.0
    %1084 = vmatpush.msra.mxu0 0.0
    %1085 = vmatpush.msra.mxu0 0.0
    %1086 = vmatpush.msra.mxu0 0.0
    %1087 = vmatpush.msra.mxu0 0.0
    %1088 = vmatpush.msra.mxu0 0.0
    %1089 = vmatpush.msra.mxu0 0.0
    %1090 = vmatpush.msra.mxu0 0.0
    %1091 = vmatpush.msra.mxu0 0.0
    %1092 = vmatpush.msra.mxu0 0.0
    %v1093 = vand.u32 %v235, 4294901760
    %v1094 = vsub.f32 %v235, %v1093
    %v1095 = vand.u32 %v1094, 4294901760
    %1096 = vmatpush.msra.mxu0 %v1095
    %v1097 = vand.u32 %v234, 4294901760
    %v1098 = vsub.f32 %v234, %v1097
    %v1099 = vand.u32 %v1098, 4294901760
    %1100 = vmatpush.msra.mxu0 %v1099
    %v1101 = vand.u32 %v233, 4294901760
    %v1102 = vsub.f32 %v233, %v1101
    %v1103 = vand.u32 %v1102, 4294901760
    %1104 = vmatpush.msra.mxu0 %v1103
    %v1105 = vand.u32 %v232, 4294901760
    %v1106 = vsub.f32 %v232, %v1105
    %v1107 = vand.u32 %v1106, 4294901760
    %1108 = vmatpush.msra.mxu0 %v1107
    %v1109 = vand.u32 %v952, 4294901760
    %1110 = vmatmul.f32.gmra.mxu0 %v1109
    %v1111 = vpop.f32.mrf.mxu0
    %v1112 = vadd.f32 %v1079, %v1111
    %1113 = vdwg.mxu0
    %1114 = vmatpush.msra.mxu0 0.0
    %1115 = vmatpush.msra.mxu0 0.0
    %1116 = vmatpush.msra.mxu0 0.0
    %1117 = vmatpush.msra.mxu0 0.0
    %1118 = vmatpush.msra.mxu0 0.0
    %1119 = vmatpush.msra.mxu0 0.0
    %1120 = vmatpush.msra.mxu0 0.0
    %1121 = vmatpush.msra.mxu0 0.0
    %1122 = vmatpush.msra.mxu0 0.0
    %1123 = vmatpush.msra.mxu0 0.0
    %1124 = vmatpush.msra.mxu0 0.0
    %1125 = vmatpush.msra.mxu0 0.0
    %v1126 = vand.u32 %v235, 4294901760
    %1127 = vmatpush.msra.mxu0 %v1126
    %v1128 = vand.u32 %v234, 4294901760
    %1129 = vmatpush.msra.mxu0 %v1128
    %v1130 = vand.u32 %v233, 4294901760
    %1131 = vmatpush.msra.mxu0 %v1130
    %v1132 = vand.u32 %v232, 4294901760
    %1133 = vmatpush.msra.mxu0 %v1132
    %v1134 = vand.u32 %v952, 4294901760
    %1135 = vmatmul.f32.gmra.mxu0 %v1134
    %v1136 = vpop.f32.mrf.mxu0
    %v1137 = vadd.f32 %v1112, %v1136
    %1138 = vdwg.mxu0
    %v1140 = vrot.slane %v1137, 2
    %v1142 = vadd.f32 %v226, %v1140
    %v1143 = vxor.u32 %v1142, 2147483648
    %v1144 = vmul.f32 %v1143, 1.442695
    %v1145 = vpow.pop %v1144
    %v1146 = vadd.f32 %v1145, 1.0
    %v1147 = vrcp.pop %v1146
    %v1148 = vmul.f32 %v1146, %v1147
    %v1149 = vsub.f32 1.0, %v1148
    %v1150 = vmul.f32 %v1147, %v1149
    %v1151 = vadd.f32 %v1147, %v1150
    %vm1152 = vweird.f32 %v1146
    %vm1153 = vweird.f32 %v1147
    %vm1154 = vmor %vm1152, %vm1153
    %v1155 = vsel %vm1154, %v1147, %v1151
    %v1156 = vand.u32 2147483647, %v1146
    %vm1157 = vcmp.eq.f32.partialorder %v1156, 8.507059e+37
    %v1158 = vand.u32 %v1146, 2147483648
    %v1159 = vor.u32 1.1754944e-38, %v1158
    %v1160 = vsel %vm1157, %v1159, %v1155
    %v1161 = vmul.f32 1.0, %v1160
    %v1162 = vadd.f32 %v1137, %v449
    %v1164 = vrot.slane %v1162, 2
    %1165 = vrot.lane.b32.xlu0 %v1164, 64
    %v1166 = vpop.permute.xlu0 %1165
    %v1168 = vmul.f32 %v1161, %v1166
    %1170 = vrot.lane.b32.xlu0 %v1168, 64
    %v1171 = vpop.permute.xlu0 %1170
    %v1173 = vadd.f32 %v226, %v1171
    %v1174 = vtanh.pop %v1173
    %v1175 = vrot.slane %v948, 2
    %1176 = vrot.lane.b32.xlu0 %v1175, 32
    %v1177 = vpop.permute.xlu0 %1176
    %v1179 = vsub.f32 %v1174, %v1177
    %1181 = vrot.lane.b32.xlu0 %v1179, 96
    %v1182 = vpop.permute.xlu0 %1181
    %v1184 = vmul.f32 %v1161, %v1182
    %v1186 = vrot.slane %v1184, 6
    %v1188 = vadd.f32 %v948, %v1186
    %1190 = vrot.lane.b32.xlu0 %v1188, 96
    %v1191 = vpop.permute.xlu0 %1190
    %v1192 = vsel %vm239, %v1191, 0
    %1194 = vmatpush.msra.mxu0 0.0
    %1195 = vmatpush.msra.mxu0 0.0
    %1196 = vmatpush.msra.mxu0 0.0
    %1197 = vmatpush.msra.mxu0 0.0
    %1198 = vmatpush.msra.mxu0 0.0
    %1199 = vmatpush.msra.mxu0 0.0
    %1200 = vmatpush.msra.mxu0 0.0
    %1201 = vmatpush.msra.mxu0 0.0
    %1202 = vmatpush.msra.mxu0 0.0
    %1203 = vmatpush.msra.mxu0 0.0
    %1204 = vmatpush.msra.mxu0 0.0
    %1205 = vmatpush.msra.mxu0 0.0
    %v1206 = vand.u32 %v235, 4294901760
    %1207 = vmatpush.msra.mxu0 %v1206
    %v1208 = vand.u32 %v234, 4294901760
    %1209 = vmatpush.msra.mxu0 %v1208
    %v1210 = vand.u32 %v233, 4294901760
    %1211 = vmatpush.msra.mxu0 %v1210
    %v1212 = vand.u32 %v232, 4294901760
    %1213 = vmatpush.msra.mxu0 %v1212
    %v1214 = vand.u32 %v1192, 4294901760
    %v1215 = vsub.f32 %v1192, %v1214
    %v1216 = vand.u32 %v1215, 4294901760
    %v1217 = vsub.f32 %v1215, %v1216
    %v1218 = vand.u32 %v1217, 4294901760
    %1219 = vmatmul.f32.gmra.mxu0 %v1218
    %v1220 = vpop.f32.mrf.mxu0
    %v1221 = vadd.f32 0.0, %v1220
    %1222 = vdwg.mxu0
    %1223 = vmatpush.msra.mxu0 0.0
    %1224 = vmatpush.msra.mxu0 0.0
    %1225 = vmatpush.msra.mxu0 0.0
    %1226 = vmatpush.msra.mxu0 0.0
    %1227 = vmatpush.msra.mxu0 0.0
    %1228 = vmatpush.msra.mxu0 0.0
    %1229 = vmatpush.msra.mxu0 0.0
    %1230 = vmatpush.msra.mxu0 0.0
    %1231 = vmatpush.msra.mxu0 0.0
    %1232 = vmatpush.msra.mxu0 0.0
    %1233 = vmatpush.msra.mxu0 0.0
    %1234 = vmatpush.msra.mxu0 0.0
    %v1235 = vand.u32 %v235, 4294901760
    %v1236 = vsub.f32 %v235, %v1235
    %v1237 = vand.u32 %v1236, 4294901760
    %v1238 = vsub.f32 %v1236, %v1237
    %v1239 = vand.u32 %v1238, 4294901760
    %1240 = vmatpush.msra.mxu0 %v1239
    %v1241 = vand.u32 %v234, 4294901760
    %v1242 = vsub.f32 %v234, %v1241
    %v1243 = vand.u32 %v1242, 4294901760
    %v1244 = vsub.f32 %v1242, %v1243
    %v1245 = vand.u32 %v1244, 4294901760
    %1246 = vmatpush.msra.mxu0 %v1245
    %v1247 = vand.u32 %v233, 4294901760
    %v1248 = vsub.f32 %v233, %v1247
    %v1249 = vand.u32 %v1248, 4294901760
    %v1250 = vsub.f32 %v1248, %v1249
    %v1251 = vand.u32 %v1250, 4294901760
    %1252 = vmatpush.msra.mxu0 %v1251
    %v1253 = vand.u32 %v232, 4294901760
    %v1254 = vsub.f32 %v232, %v1253
    %v1255 = vand.u32 %v1254, 4294901760
    %v1256 = vsub.f32 %v1254, %v1255
    %v1257 = vand.u32 %v1256, 4294901760
    %1258 = vmatpush.msra.mxu0 %v1257
    %v1259 = vand.u32 %v1192, 4294901760
    %1260 = vmatmul.f32.gmra.mxu0 %v1259
    %v1261 = vpop.f32.mrf.mxu0
    %v1262 = vadd.f32 %v1221, %v1261
    %1263 = vdwg.mxu0
    %1264 = vmatpush.msra.mxu0 0.0
    %1265 = vmatpush.msra.mxu0 0.0
    %1266 = vmatpush.msra.mxu0 0.0
    %1267 = vmatpush.msra.mxu0 0.0
    %1268 = vmatpush.msra.mxu0 0.0
    %1269 = vmatpush.msra.mxu0 0.0
    %1270 = vmatpush.msra.mxu0 0.0
    %1271 = vmatpush.msra.mxu0 0.0
    %1272 = vmatpush.msra.mxu0 0.0
    %1273 = vmatpush.msra.mxu0 0.0
    %1274 = vmatpush.msra.mxu0 0.0
    %1275 = vmatpush.msra.mxu0 0.0
    %v1276 = vand.u32 %v235, 4294901760
    %v1277 = vsub.f32 %v235, %v1276
    %1278 = vmatpush.msra.mxu0 %v1277
    %v1279 = vand.u32 %v234, 4294901760
    %v1280 = vsub.f32 %v234, %v1279
    %1281 = vmatpush.msra.mxu0 %v1280
    %v1282 = vand.u32 %v233, 4294901760
    %v1283 = vsub.f32 %v233, %v1282
    %1284 = vmatpush.msra.mxu0 %v1283
    %v1285 = vand.u32 %v232, 4294901760
    %v1286 = vsub.f32 %v232, %v1285
    %1287 = vmatpush.msra.mxu0 %v1286
    %v1288 = vand.u32 %v1192, 4294901760
    %v1289 = vsub.f32 %v1192, %v1288
    %1290 = vmatmul.f32.gmra.mxu0 %v1289
    %v1291 = vpop.f32.mrf.mxu0
    %v1292 = vadd.f32 %v1262, %v1291
    %1293 = vdwg.mxu0
    %1294 = vmatpush.msra.mxu0 0.0
    %1295 = vmatpush.msra.mxu0 0.0
    %1296 = vmatpush.msra.mxu0 0.0
    %1297 = vmatpush.msra.mxu0 0.0
    %1298 = vmatpush.msra.mxu0 0.0
    %1299 = vmatpush.msra.mxu0 0.0
    %1300 = vmatpush.msra.mxu0 0.0
    %1301 = vmatpush.msra.mxu0 0.0
    %1302 = vmatpush.msra.mxu0 0.0
    %1303 = vmatpush.msra.mxu0 0.0
    %1304 = vmatpush.msra.mxu0 0.0
    %1305 = vmatpush.msra.mxu0 0.0
    %v1306 = vand.u32 %v235, 4294901760
    %1307 = vmatpush.msra.mxu0 %v1306
    %v1308 = vand.u32 %v234, 4294901760
    %1309 = vmatpush.msra.mxu0 %v1308
    %v1310 = vand.u32 %v233, 4294901760
    %1311 = vmatpush.msra.mxu0 %v1310
    %v1312 = vand.u32 %v232, 4294901760
    %1313 = vmatpush.msra.mxu0 %v1312
    %v1314 = vand.u32 %v1192, 4294901760
    %v1315 = vsub.f32 %v1192, %v1314
    %v1316 = vand.u32 %v1315, 4294901760
    %1317 = vmatmul.f32.gmra.mxu0 %v1316
    %v1318 = vpop.f32.mrf.mxu0
    %v1319 = vadd.f32 %v1292, %v1318
    %1320 = vdwg.mxu0
    %1321 = vmatpush.msra.mxu0 0.0
    %1322 = vmatpush.msra.mxu0 0.0
    %1323 = vmatpush.msra.mxu0 0.0
    %1324 = vmatpush.msra.mxu0 0.0
    %1325 = vmatpush.msra.mxu0 0.0
    %1326 = vmatpush.msra.mxu0 0.0
    %1327 = vmatpush.msra.mxu0 0.0
    %1328 = vmatpush.msra.mxu0 0.0
    %1329 = vmatpush.msra.mxu0 0.0
    %1330 = vmatpush.msra.mxu0 0.0
    %1331 = vmatpush.msra.mxu0 0.0
    %1332 = vmatpush.msra.mxu0 0.0
    %v1333 = vand.u32 %v235, 4294901760
    %v1334 = vsub.f32 %v235, %v1333
    %v1335 = vand.u32 %v1334, 4294901760
    %1336 = vmatpush.msra.mxu0 %v1335
    %v1337 = vand.u32 %v234, 4294901760
    %v1338 = vsub.f32 %v234, %v1337
    %v1339 = vand.u32 %v1338, 4294901760
    %1340 = vmatpush.msra.mxu0 %v1339
    %v1341 = vand.u32 %v233, 4294901760
    %v1342 = vsub.f32 %v233, %v1341
    %v1343 = vand.u32 %v1342, 4294901760
    %1344 = vmatpush.msra.mxu0 %v1343
    %v1345 = vand.u32 %v232, 4294901760
    %v1346 = vsub.f32 %v232, %v1345
    %v1347 = vand.u32 %v1346, 4294901760
    %1348 = vmatpush.msra.mxu0 %v1347
    %v1349 = vand.u32 %v1192, 4294901760
    %1350 = vmatmul.f32.gmra.mxu0 %v1349
    %v1351 = vpop.f32.mrf.mxu0
    %v1352 = vadd.f32 %v1319, %v1351
    %1353 = vdwg.mxu0
    %1354 = vmatpush.msra.mxu0 0.0
    %1355 = vmatpush.msra.mxu0 0.0
    %1356 = vmatpush.msra.mxu0 0.0
    %1357 = vmatpush.msra.mxu0 0.0
    %1358 = vmatpush.msra.mxu0 0.0
    %1359 = vmatpush.msra.mxu0 0.0
    %1360 = vmatpush.msra.mxu0 0.0
    %1361 = vmatpush.msra.mxu0 0.0
    %1362 = vmatpush.msra.mxu0 0.0
    %1363 = vmatpush.msra.mxu0 0.0
    %1364 = vmatpush.msra.mxu0 0.0
    %1365 = vmatpush.msra.mxu0 0.0
    %v1366 = vand.u32 %v235, 4294901760
    %1367 = vmatpush.msra.mxu0 %v1366
    %v1368 = vand.u32 %v234, 4294901760
    %1369 = vmatpush.msra.mxu0 %v1368
    %v1370 = vand.u32 %v233, 4294901760
    %1371 = vmatpush.msra.mxu0 %v1370
    %v1372 = vand.u32 %v232, 4294901760
    %1373 = vmatpush.msra.mxu0 %v1372
    %v1374 = vand.u32 %v1192, 4294901760
    %1375 = vmatmul.f32.gmra.mxu0 %v1374
    %v1376 = vpop.f32.mrf.mxu0
    %v1377 = vadd.f32 %v1352, %v1376
    %1378 = vdwg.mxu0
    %v1379 = vadd.f32 %v230, %v1377
    %v1380 = vxor.u32 %v1379, 2147483648
    %v1381 = vmul.f32 %v1380, 1.442695
    %v1382 = vpow.pop %v1381
    %v1383 = vadd.f32 %v1382, 1.0
    %v1384 = vrcp.pop %v1383
    %v1385 = vmul.f32 %v1383, %v1384
    %v1386 = vsub.f32 1.0, %v1385
    %v1387 = vmul.f32 %v1384, %v1386
    %v1388 = vadd.f32 %v1384, %v1387
    %vm1389 = vweird.f32 %v1383
    %vm1390 = vweird.f32 %v1384
    %vm1391 = vmor %vm1389, %vm1390
    %v1392 = vsel %vm1391, %v1384, %v1388
    %v1393 = vand.u32 2147483647, %v1383
    %vm1394 = vcmp.eq.f32.partialorder %v1393, 8.507059e+37
    %v1395 = vand.u32 %v1383, 2147483648
    %v1396 = vor.u32 1.1754944e-38, %v1395
    %v1397 = vsel %vm1394, %v1396, %v1392
    %v1398 = vmul.f32 1.0, %v1397
    %v1399 = vadd.f32 %v1377, %v449
    %1401 = vrot.lane.b32.xlu0 %v1399, 64
    %v1402 = vpop.permute.xlu0 %1401
    %v1404 = vmul.f32 %v1398, %v1402
    %1406 = vrot.lane.b32.xlu0 %v1404, 64
    %v1407 = vpop.permute.xlu0 %1406
    %v1409 = vadd.f32 %v230, %v1407
    %v1410 = vtanh.pop %v1409
    %1411 = vrot.lane.b32.xlu0 %v1188, 32
    %v1412 = vpop.permute.xlu0 %1411
    %v1414 = vsub.f32 %v1410, %v1412
    %1416 = vrot.lane.b32.xlu0 %v1414, 96
    %v1417 = vpop.permute.xlu0 %1416
    %v1419 = vmul.f32 %v1398, %v1417
    %v1420 = vadd.f32 %v1188, %v1419
    %1422 = vrot.lane.b32.xlu0 %v1420, 96
    %v1423 = vpop.permute.xlu0 %1422
    %v1424 = vsel %vm239, %v1423, 0
    %1426 = vmatpush.msra.mxu0 0.0
    %1427 = vmatpush.msra.mxu0 0.0
    %1428 = vmatpush.msra.mxu0 0.0
    %1429 = vmatpush.msra.mxu0 0.0
    %1430 = vmatpush.msra.mxu0 0.0
    %1431 = vmatpush.msra.mxu0 0.0
    %1432 = vmatpush.msra.mxu0 0.0
    %1433 = vmatpush.msra.mxu0 0.0
    %1434 = vmatpush.msra.mxu0 0.0
    %1435 = vmatpush.msra.mxu0 0.0
    %1436 = vmatpush.msra.mxu0 0.0
    %1437 = vmatpush.msra.mxu0 0.0
    %v1438 = vand.u32 %v235, 4294901760
    %1439 = vmatpush.msra.mxu0 %v1438
    %v1440 = vand.u32 %v234, 4294901760
    %1441 = vmatpush.msra.mxu0 %v1440
    %v1442 = vand.u32 %v233, 4294901760
    %1443 = vmatpush.msra.mxu0 %v1442
    %v1444 = vand.u32 %v232, 4294901760
    %1445 = vmatpush.msra.mxu0 %v1444
    %v1446 = vand.u32 %v1424, 4294901760
    %v1447 = vsub.f32 %v1424, %v1446
    %v1448 = vand.u32 %v1447, 4294901760
    %v1449 = vsub.f32 %v1447, %v1448
    %v1450 = vand.u32 %v1449, 4294901760
    %1451 = vmatmul.f32.gmra.mxu0 %v1450
    %v1452 = vpop.f32.mrf.mxu0
    %v1453 = vadd.f32 0.0, %v1452
    %1454 = vdwg.mxu0
    %1455 = vmatpush.msra.mxu0 0.0
    %1456 = vmatpush.msra.mxu0 0.0
    %1457 = vmatpush.msra.mxu0 0.0
    %1458 = vmatpush.msra.mxu0 0.0
    %1459 = vmatpush.msra.mxu0 0.0
    %1460 = vmatpush.msra.mxu0 0.0
    %1461 = vmatpush.msra.mxu0 0.0
    %1462 = vmatpush.msra.mxu0 0.0
    %1463 = vmatpush.msra.mxu0 0.0
    %1464 = vmatpush.msra.mxu0 0.0
    %1465 = vmatpush.msra.mxu0 0.0
    %1466 = vmatpush.msra.mxu0 0.0
    %v1467 = vand.u32 %v235, 4294901760
    %v1468 = vsub.f32 %v235, %v1467
    %v1469 = vand.u32 %v1468, 4294901760
    %v1470 = vsub.f32 %v1468, %v1469
    %v1471 = vand.u32 %v1470, 4294901760
    %1472 = vmatpush.msra.mxu0 %v1471
    %v1473 = vand.u32 %v234, 4294901760
    %v1474 = vsub.f32 %v234, %v1473
    %v1475 = vand.u32 %v1474, 4294901760
    %v1476 = vsub.f32 %v1474, %v1475
    %v1477 = vand.u32 %v1476, 4294901760
    %1478 = vmatpush.msra.mxu0 %v1477
    %v1479 = vand.u32 %v233, 4294901760
    %v1480 = vsub.f32 %v233, %v1479
    %v1481 = vand.u32 %v1480, 4294901760
    %v1482 = vsub.f32 %v1480, %v1481
    %v1483 = vand.u32 %v1482, 4294901760
    %1484 = vmatpush.msra.mxu0 %v1483
    %v1485 = vand.u32 %v232, 4294901760
    %v1486 = vsub.f32 %v232, %v1485
    %v1487 = vand.u32 %v1486, 4294901760
    %v1488 = vsub.f32 %v1486, %v1487
    %v1489 = vand.u32 %v1488, 4294901760
    %1490 = vmatpush.msra.mxu0 %v1489
    %v1491 = vand.u32 %v1424, 4294901760
    %1492 = vmatmul.f32.gmra.mxu0 %v1491
    %v1493 = vpop.f32.mrf.mxu0
    %v1494 = vadd.f32 %v1453, %v1493
    %1495 = vdwg.mxu0
    %1496 = vmatpush.msra.mxu0 0.0
    %1497 = vmatpush.msra.mxu0 0.0
    %1498 = vmatpush.msra.mxu0 0.0
    %1499 = vmatpush.msra.mxu0 0.0
    %1500 = vmatpush.msra.mxu0 0.0
    %1501 = vmatpush.msra.mxu0 0.0
    %1502 = vmatpush.msra.mxu0 0.0
    %1503 = vmatpush.msra.mxu0 0.0
    %1504 = vmatpush.msra.mxu0 0.0
    %1505 = vmatpush.msra.mxu0 0.0
    %1506 = vmatpush.msra.mxu0 0.0
    %1507 = vmatpush.msra.mxu0 0.0
    %v1508 = vand.u32 %v235, 4294901760
    %v1509 = vsub.f32 %v235, %v1508
    %1510 = vmatpush.msra.mxu0 %v1509
    %v1511 = vand.u32 %v234, 4294901760
    %v1512 = vsub.f32 %v234, %v1511
    %1513 = vmatpush.msra.mxu0 %v1512
    %v1514 = vand.u32 %v233, 4294901760
    %v1515 = vsub.f32 %v233, %v1514
    %1516 = vmatpush.msra.mxu0 %v1515
    %v1517 = vand.u32 %v232, 4294901760
    %v1518 = vsub.f32 %v232, %v1517
    %1519 = vmatpush.msra.mxu0 %v1518
    %v1520 = vand.u32 %v1424, 4294901760
    %v1521 = vsub.f32 %v1424, %v1520
    %1522 = vmatmul.f32.gmra.mxu0 %v1521
    %v1523 = vpop.f32.mrf.mxu0
    %v1524 = vadd.f32 %v1494, %v1523
    %1525 = vdwg.mxu0
    %1526 = vmatpush.msra.mxu0 0.0
    %1527 = vmatpush.msra.mxu0 0.0
    %1528 = vmatpush.msra.mxu0 0.0
    %1529 = vmatpush.msra.mxu0 0.0
    %1530 = vmatpush.msra.mxu0 0.0
    %1531 = vmatpush.msra.mxu0 0.0
    %1532 = vmatpush.msra.mxu0 0.0
    %1533 = vmatpush.msra.mxu0 0.0
    %1534 = vmatpush.msra.mxu0 0.0
    %1535 = vmatpush.msra.mxu0 0.0
    %1536 = vmatpush.msra.mxu0 0.0
    %1537 = vmatpush.msra.mxu0 0.0
    %v1538 = vand.u32 %v235, 4294901760
    %1539 = vmatpush.msra.mxu0 %v1538
    %v1540 = vand.u32 %v234, 4294901760
    %1541 = vmatpush.msra.mxu0 %v1540
    %v1542 = vand.u32 %v233, 4294901760
    %1543 = vmatpush.msra.mxu0 %v1542
    %v1544 = vand.u32 %v232, 4294901760
    %1545 = vmatpush.msra.mxu0 %v1544
    %v1546 = vand.u32 %v1424, 4294901760
    %v1547 = vsub.f32 %v1424, %v1546
    %v1548 = vand.u32 %v1547, 4294901760
    %1549 = vmatmul.f32.gmra.mxu0 %v1548
    %v1550 = vpop.f32.mrf.mxu0
    %v1551 = vadd.f32 %v1524, %v1550
    %1552 = vdwg.mxu0
    %1553 = vmatpush.msra.mxu0 0.0
    %1554 = vmatpush.msra.mxu0 0.0
    %1555 = vmatpush.msra.mxu0 0.0
    %1556 = vmatpush.msra.mxu0 0.0
    %1557 = vmatpush.msra.mxu0 0.0
    %1558 = vmatpush.msra.mxu0 0.0
    %1559 = vmatpush.msra.mxu0 0.0
    %1560 = vmatpush.msra.mxu0 0.0
    %1561 = vmatpush.msra.mxu0 0.0
    %1562 = vmatpush.msra.mxu0 0.0
    %1563 = vmatpush.msra.mxu0 0.0
    %1564 = vmatpush.msra.mxu0 0.0
    %v1565 = vand.u32 %v235, 4294901760
    %v1566 = vsub.f32 %v235, %v1565
    %v1567 = vand.u32 %v1566, 4294901760
    %1568 = vmatpush.msra.mxu0 %v1567
    %v1569 = vand.u32 %v234, 4294901760
    %v1570 = vsub.f32 %v234, %v1569
    %v1571 = vand.u32 %v1570, 4294901760
    %1572 = vmatpush.msra.mxu0 %v1571
    %v1573 = vand.u32 %v233, 4294901760
    %v1574 = vsub.f32 %v233, %v1573
    %v1575 = vand.u32 %v1574, 4294901760
    %1576 = vmatpush.msra.mxu0 %v1575
    %v1577 = vand.u32 %v232, 4294901760
    %v1578 = vsub.f32 %v232, %v1577
    %v1579 = vand.u32 %v1578, 4294901760
    %1580 = vmatpush.msra.mxu0 %v1579
    %v1581 = vand.u32 %v1424, 4294901760
    %1582 = vmatmul.f32.gmra.mxu0 %v1581
    %v1583 = vpop.f32.mrf.mxu0
    %v1584 = vadd.f32 %v1551, %v1583
    %1585 = vdwg.mxu0
    %1586 = vmatpush.msra.mxu0 0.0
    %1587 = vmatpush.msra.mxu0 0.0
    %1588 = vmatpush.msra.mxu0 0.0
    %1589 = vmatpush.msra.mxu0 0.0
    %1590 = vmatpush.msra.mxu0 0.0
    %1591 = vmatpush.msra.mxu0 0.0
    %1592 = vmatpush.msra.mxu0 0.0
    %1593 = vmatpush.msra.mxu0 0.0
    %1594 = vmatpush.msra.mxu0 0.0
    %1595 = vmatpush.msra.mxu0 0.0
    %1596 = vmatpush.msra.mxu0 0.0
    %1597 = vmatpush.msra.mxu0 0.0
    %v1598 = vand.u32 %v235, 4294901760
    %1599 = vmatpush.msra.mxu0 %v1598
    %v1600 = vand.u32 %v234, 4294901760
    %1601 = vmatpush.msra.mxu0 %v1600
    %v1602 = vand.u32 %v233, 4294901760
    %1603 = vmatpush.msra.mxu0 %v1602
    %v1604 = vand.u32 %v232, 4294901760
    %1605 = vmatpush.msra.mxu0 %v1604
    %v1606 = vand.u32 %v1424, 4294901760
    %1607 = vmatmul.f32.gmra.mxu0 %v1606
    %v1608 = vpop.f32.mrf.mxu0
    %v1609 = vadd.f32 %v1584, %v1608
    %1610 = vdwg.mxu0
    %v1612 = vrot.slane %v1609, 6
    %v1614 = vadd.f32 %v230, %v1612
    %v1615 = vxor.u32 %v1614, 2147483648
    %v1616 = vmul.f32 %v1615, 1.442695
    %v1617 = vpow.pop %v1616
    %v1618 = vadd.f32 %v1617, 1.0
    %v1619 = vrcp.pop %v1618
    %v1620 = vmul.f32 %v1618, %v1619
    %v1621 = vsub.f32 1.0, %v1620
    %v1622 = vmul.f32 %v1619, %v1621
    %v1623 = vadd.f32 %v1619, %v1622
    %vm1624 = vweird.f32 %v1618
    %vm1625 = vweird.f32 %v1619
    %vm1626 = vmor %vm1624, %vm1625
    %v1627 = vsel %vm1626, %v1619, %v1623
    %v1628 = vand.u32 2147483647, %v1618
    %vm1629 = vcmp.eq.f32.partialorder %v1628, 8.507059e+37
    %v1630 = vand.u32 %v1618, 2147483648
    %v1631 = vor.u32 1.1754944e-38, %v1630
    %v1632 = vsel %vm1629, %v1631, %v1627
    %v1633 = vmul.f32 1.0, %v1632
    %v1634 = vadd.f32 %v1609, %v449
    %v1636 = vrot.slane %v1634, 6
    %1637 = vrot.lane.b32.xlu0 %v1636, 64
    %v1638 = vpop.permute.xlu0 %1637
    %v1640 = vmul.f32 %v1633, %v1638
    %1642 = vrot.lane.b32.xlu0 %v1640, 64
    %v1643 = vpop.permute.xlu0 %1642
    %v1645 = vadd.f32 %v230, %v1643
    %v1646 = vtanh.pop %v1645
    %v1647 = vrot.slane %v1420, 6
    %1648 = vrot.lane.b32.xlu0 %v1647, 32
    %v1649 = vpop.permute.xlu0 %1648
    %v1651 = vsub.f32 %v1646, %v1649
    %1653 = vrot.lane.b32.xlu0 %v1651, 96
    %v1654 = vpop.permute.xlu0 %1653
    %v1656 = vmul.f32 %v1633, %v1654
    %v1658 = vrot.slane %v1656, 2
    %v1660 = vadd.f32 %v1420, %v1658
    %1662 = vrot.lane.b32.xlu0 %v1660, 96
    %v1663 = vpop.permute.xlu0 %1662
    %v1664 = vsel %vm239, %v1663, 0
    %1666 = vmatpush.msra.mxu0 0.0
    %1667 = vmatpush.msra.mxu0 0.0
    %1668 = vmatpush.msra.mxu0 0.0
    %1669 = vmatpush.msra.mxu0 0.0
    %1670 = vmatpush.msra.mxu0 0.0
    %1671 = vmatpush.msra.mxu0 0.0
    %1672 = vmatpush.msra.mxu0 0.0
    %1673 = vmatpush.msra.mxu0 0.0
    %1674 = vmatpush.msra.mxu0 0.0
    %1675 = vmatpush.msra.mxu0 0.0
    %1676 = vmatpush.msra.mxu0 0.0
    %1677 = vmatpush.msra.mxu0 0.0
    %v1678 = vand.u32 %v235, 4294901760
    %1679 = vmatpush.msra.mxu0 %v1678
    %v1680 = vand.u32 %v234, 4294901760
    %1681 = vmatpush.msra.mxu0 %v1680
    %v1682 = vand.u32 %v233, 4294901760
    %1683 = vmatpush.msra.mxu0 %v1682
    %v1684 = vand.u32 %v232, 4294901760
    %1685 = vmatpush.msra.mxu0 %v1684
    %v1686 = vand.u32 %v1664, 4294901760
    %v1687 = vsub.f32 %v1664, %v1686
    %v1688 = vand.u32 %v1687, 4294901760
    %v1689 = vsub.f32 %v1687, %v1688
    %v1690 = vand.u32 %v1689, 4294901760
    %1691 = vmatmul.f32.gmra.mxu0 %v1690
    %v1692 = vpop.f32.mrf.mxu0
    %v1693 = vadd.f32 0.0, %v1692
    %1694 = vdwg.mxu0
    %1695 = vmatpush.msra.mxu0 0.0
    %1696 = vmatpush.msra.mxu0 0.0
    %1697 = vmatpush.msra.mxu0 0.0
    %1698 = vmatpush.msra.mxu0 0.0
    %1699 = vmatpush.msra.mxu0 0.0
    %1700 = vmatpush.msra.mxu0 0.0
    %1701 = vmatpush.msra.mxu0 0.0
    %1702 = vmatpush.msra.mxu0 0.0
    %1703 = vmatpush.msra.mxu0 0.0
    %1704 = vmatpush.msra.mxu0 0.0
    %1705 = vmatpush.msra.mxu0 0.0
    %1706 = vmatpush.msra.mxu0 0.0
    %v1707 = vand.u32 %v235, 4294901760
    %v1708 = vsub.f32 %v235, %v1707
    %v1709 = vand.u32 %v1708, 4294901760
    %v1710 = vsub.f32 %v1708, %v1709
    %v1711 = vand.u32 %v1710, 4294901760
    %1712 = vmatpush.msra.mxu0 %v1711
    %v1713 = vand.u32 %v234, 4294901760
    %v1714 = vsub.f32 %v234, %v1713
    %v1715 = vand.u32 %v1714, 4294901760
    %v1716 = vsub.f32 %v1714, %v1715
    %v1717 = vand.u32 %v1716, 4294901760
    %1718 = vmatpush.msra.mxu0 %v1717
    %v1719 = vand.u32 %v233, 4294901760
    %v1720 = vsub.f32 %v233, %v1719
    %v1721 = vand.u32 %v1720, 4294901760
    %v1722 = vsub.f32 %v1720, %v1721
    %v1723 = vand.u32 %v1722, 4294901760
    %1724 = vmatpush.msra.mxu0 %v1723
    %v1725 = vand.u32 %v232, 4294901760
    %v1726 = vsub.f32 %v232, %v1725
    %v1727 = vand.u32 %v1726, 4294901760
    %v1728 = vsub.f32 %v1726, %v1727
    %v1729 = vand.u32 %v1728, 4294901760
    %1730 = vmatpush.msra.mxu0 %v1729
    %v1731 = vand.u32 %v1664, 4294901760
    %1732 = vmatmul.f32.gmra.mxu0 %v1731
    %v1733 = vpop.f32.mrf.mxu0
    %v1734 = vadd.f32 %v1693, %v1733
    %1735 = vdwg.mxu0
    %1736 = vmatpush.msra.mxu0 0.0
    %1737 = vmatpush.msra.mxu0 0.0
    %1738 = vmatpush.msra.mxu0 0.0
    %1739 = vmatpush.msra.mxu0 0.0
    %1740 = vmatpush.msra.mxu0 0.0
    %1741 = vmatpush.msra.mxu0 0.0
    %1742 = vmatpush.msra.mxu0 0.0
    %1743 = vmatpush.msra.mxu0 0.0
    %1744 = vmatpush.msra.mxu0 0.0
    %1745 = vmatpush.msra.mxu0 0.0
    %1746 = vmatpush.msra.mxu0 0.0
    %1747 = vmatpush.msra.mxu0 0.0
    %v1748 = vand.u32 %v235, 4294901760
    %v1749 = vsub.f32 %v235, %v1748
    %1750 = vmatpush.msra.mxu0 %v1749
    %v1751 = vand.u32 %v234, 4294901760
    %v1752 = vsub.f32 %v234, %v1751
    %1753 = vmatpush.msra.mxu0 %v1752
    %v1754 = vand.u32 %v233, 4294901760
    %v1755 = vsub.f32 %v233, %v1754
    %1756 = vmatpush.msra.mxu0 %v1755
    %v1757 = vand.u32 %v232, 4294901760
    %v1758 = vsub.f32 %v232, %v1757
    %1759 = vmatpush.msra.mxu0 %v1758
    %v1760 = vand.u32 %v1664, 4294901760
    %v1761 = vsub.f32 %v1664, %v1760
    %1762 = vmatmul.f32.gmra.mxu0 %v1761
    %v1763 = vpop.f32.mrf.mxu0
    %v1764 = vadd.f32 %v1734, %v1763
    %1765 = vdwg.mxu0
    %1766 = vmatpush.msra.mxu0 0.0
    %1767 = vmatpush.msra.mxu0 0.0
    %1768 = vmatpush.msra.mxu0 0.0
    %1769 = vmatpush.msra.mxu0 0.0
    %1770 = vmatpush.msra.mxu0 0.0
    %1771 = vmatpush.msra.mxu0 0.0
    %1772 = vmatpush.msra.mxu0 0.0
    %1773 = vmatpush.msra.mxu0 0.0
    %1774 = vmatpush.msra.mxu0 0.0
    %1775 = vmatpush.msra.mxu0 0.0
    %1776 = vmatpush.msra.mxu0 0.0
    %1777 = vmatpush.msra.mxu0 0.0
    %v1778 = vand.u32 %v235, 4294901760
    %1779 = vmatpush.msra.mxu0 %v1778
    %v1780 = vand.u32 %v234, 4294901760
    %1781 = vmatpush.msra.mxu0 %v1780
    %v1782 = vand.u32 %v233, 4294901760
    %1783 = vmatpush.msra.mxu0 %v1782
    %v1784 = vand.u32 %v232, 4294901760
    %1785 = vmatpush.msra.mxu0 %v1784
    %v1786 = vand.u32 %v1664, 4294901760
    %v1787 = vsub.f32 %v1664, %v1786
    %v1788 = vand.u32 %v1787, 4294901760
    %1789 = vmatmul.f32.gmra.mxu0 %v1788
    %v1790 = vpop.f32.mrf.mxu0
    %v1791 = vadd.f32 %v1764, %v1790
    %1792 = vdwg.mxu0
    %1793 = vmatpush.msra.mxu0 0.0
    %1794 = vmatpush.msra.mxu0 0.0
    %1795 = vmatpush.msra.mxu0 0.0
    %1796 = vmatpush.msra.mxu0 0.0
    %1797 = vmatpush.msra.mxu0 0.0
    %1798 = vmatpush.msra.mxu0 0.0
    %1799 = vmatpush.msra.mxu0 0.0
    %1800 = vmatpush.msra.mxu0 0.0
    %1801 = vmatpush.msra.mxu0 0.0
    %1802 = vmatpush.msra.mxu0 0.0
    %1803 = vmatpush.msra.mxu0 0.0
    %1804 = vmatpush.msra.mxu0 0.0
    %v1805 = vand.u32 %v235, 4294901760
    %v1806 = vsub.f32 %v235, %v1805
    %v1807 = vand.u32 %v1806, 4294901760
    %1808 = vmatpush.msra.mxu0 %v1807
    %v1809 = vand.u32 %v234, 4294901760
    %v1810 = vsub.f32 %v234, %v1809
    %v1811 = vand.u32 %v1810, 4294901760
    %1812 = vmatpush.msra.mxu0 %v1811
    %v1813 = vand.u32 %v233, 4294901760
    %v1814 = vsub.f32 %v233, %v1813
    %v1815 = vand.u32 %v1814, 4294901760
    %1816 = vmatpush.msra.mxu0 %v1815
    %v1817 = vand.u32 %v232, 4294901760
    %v1818 = vsub.f32 %v232, %v1817
    %v1819 = vand.u32 %v1818, 4294901760
    %1820 = vmatpush.msra.mxu0 %v1819
    %v1821 = vand.u32 %v1664, 4294901760
    %1822 = vmatmul.f32.gmra.mxu0 %v1821
    %v1823 = vpop.f32.mrf.mxu0
    %v1824 = vadd.f32 %v1791, %v1823
    %1825 = vdwg.mxu0
    %1826 = vmatpush.msra.mxu0 0.0
    %1827 = vmatpush.msra.mxu0 0.0
    %1828 = vmatpush.msra.mxu0 0.0
    %1829 = vmatpush.msra.mxu0 0.0
    %1830 = vmatpush.msra.mxu0 0.0
    %1831 = vmatpush.msra.mxu0 0.0
    %1832 = vmatpush.msra.mxu0 0.0
    %1833 = vmatpush.msra.mxu0 0.0
    %1834 = vmatpush.msra.mxu0 0.0
    %1835 = vmatpush.msra.mxu0 0.0
    %1836 = vmatpush.msra.mxu0 0.0
    %1837 = vmatpush.msra.mxu0 0.0
    %v1838 = vand.u32 %v235, 4294901760
    %1839 = vmatpush.msra.mxu0 %v1838
    %v1840 = vand.u32 %v234, 4294901760
    %1841 = vmatpush.msra.mxu0 %v1840
    %v1842 = vand.u32 %v233, 4294901760
    %1843 = vmatpush.msra.mxu0 %v1842
    %v1844 = vand.u32 %v232, 4294901760
    %1845 = vmatpush.msra.mxu0 %v1844
    %v1846 = vand.u32 %v1664, 4294901760
    %1847 = vmatmul.f32.gmra.mxu0 %v1846
    %v1848 = vpop.f32.mrf.mxu0
    %v1849 = vadd.f32 %v1824, %v1848
    %1850 = vdwg.mxu0
    %v1852 = vrot.slane %v1849, 4
    %v1854 = vadd.f32 %v230, %v1852
    %v1855 = vxor.u32 %v1854, 2147483648
    %v1856 = vmul.f32 %v1855, 1.442695
    %v1857 = vpow.pop %v1856
    %v1858 = vadd.f32 %v1857, 1.0
    %v1859 = vrcp.pop %v1858
    %v1860 = vmul.f32 %v1858, %v1859
    %v1861 = vsub.f32 1.0, %v1860
    %v1862 = vmul.f32 %v1859, %v1861
    %v1863 = vadd.f32 %v1859, %v1862
    %vm1864 = vweird.f32 %v1858
    %vm1865 = vweird.f32 %v1859
    %vm1866 = vmor %vm1864, %vm1865
    %v1867 = vsel %vm1866, %v1859, %v1863
    %v1868 = vand.u32 2147483647, %v1858
    %vm1869 = vcmp.eq.f32.partialorder %v1868, 8.507059e+37
    %v1870 = vand.u32 %v1858, 2147483648
    %v1871 = vor.u32 1.1754944e-38, %v1870
    %v1872 = vsel %vm1869, %v1871, %v1867
    %v1873 = vmul.f32 1.0, %v1872
    %v1874 = vadd.f32 %v1849, %v449
    %v1876 = vrot.slane %v1874, 4
    %1877 = vrot.lane.b32.xlu0 %v1876, 64
    %v1878 = vpop.permute.xlu0 %1877
    %v1880 = vmul.f32 %v1873, %v1878
    %1882 = vrot.lane.b32.xlu0 %v1880, 64
    %v1883 = vpop.permute.xlu0 %1882
    %v1885 = vadd.f32 %v230, %v1883
    %v1886 = vtanh.pop %v1885
    %v1887 = vrot.slane %v1660, 4
    %1888 = vrot.lane.b32.xlu0 %v1887, 32
    %v1889 = vpop.permute.xlu0 %1888
    %v1891 = vsub.f32 %v1886, %v1889
    %1893 = vrot.lane.b32.xlu0 %v1891, 96
    %v1894 = vpop.permute.xlu0 %1893
    %v1896 = vmul.f32 %v1873, %v1894
    %v1898 = vrot.slane %v1896, 4
    %v1900 = vadd.f32 %v1660, %v1898
    %1902 = vrot.lane.b32.xlu0 %v1900, 96
    %v1903 = vpop.permute.xlu0 %1902
    %v1904 = vsel %vm239, %v1903, 0
    %1906 = vmatpush.msra.mxu0 0.0
    %1907 = vmatpush.msra.mxu0 0.0
    %1908 = vmatpush.msra.mxu0 0.0
    %1909 = vmatpush.msra.mxu0 0.0
    %1910 = vmatpush.msra.mxu0 0.0
    %1911 = vmatpush.msra.mxu0 0.0
    %1912 = vmatpush.msra.mxu0 0.0
    %1913 = vmatpush.msra.mxu0 0.0
    %1914 = vmatpush.msra.mxu0 0.0
    %1915 = vmatpush.msra.mxu0 0.0
    %1916 = vmatpush.msra.mxu0 0.0
    %1917 = vmatpush.msra.mxu0 0.0
    %v1918 = vand.u32 %v235, 4294901760
    %1919 = vmatpush.msra.mxu0 %v1918
    %v1920 = vand.u32 %v234, 4294901760
    %1921 = vmatpush.msra.mxu0 %v1920
    %v1922 = vand.u32 %v233, 4294901760
    %1923 = vmatpush.msra.mxu0 %v1922
    %v1924 = vand.u32 %v232, 4294901760
    %1925 = vmatpush.msra.mxu0 %v1924
    %v1926 = vand.u32 %v1904, 4294901760
    %v1927 = vsub.f32 %v1904, %v1926
    %v1928 = vand.u32 %v1927, 4294901760
    %v1929 = vsub.f32 %v1927, %v1928
    %v1930 = vand.u32 %v1929, 4294901760
    %1931 = vmatmul.f32.gmra.mxu0 %v1930
    %v1932 = vpop.f32.mrf.mxu0
    %v1933 = vadd.f32 0.0, %v1932
    %1934 = vdwg.mxu0
    %1935 = vmatpush.msra.mxu0 0.0
    %1936 = vmatpush.msra.mxu0 0.0
    %1937 = vmatpush.msra.mxu0 0.0
    %1938 = vmatpush.msra.mxu0 0.0
    %1939 = vmatpush.msra.mxu0 0.0
    %1940 = vmatpush.msra.mxu0 0.0
    %1941 = vmatpush.msra.mxu0 0.0
    %1942 = vmatpush.msra.mxu0 0.0
    %1943 = vmatpush.msra.mxu0 0.0
    %1944 = vmatpush.msra.mxu0 0.0
    %1945 = vmatpush.msra.mxu0 0.0
    %1946 = vmatpush.msra.mxu0 0.0
    %v1947 = vand.u32 %v235, 4294901760
    %v1948 = vsub.f32 %v235, %v1947
    %v1949 = vand.u32 %v1948, 4294901760
    %v1950 = vsub.f32 %v1948, %v1949
    %v1951 = vand.u32 %v1950, 4294901760
    %1952 = vmatpush.msra.mxu0 %v1951
    %v1953 = vand.u32 %v234, 4294901760
    %v1954 = vsub.f32 %v234, %v1953
    %v1955 = vand.u32 %v1954, 4294901760
    %v1956 = vsub.f32 %v1954, %v1955
    %v1957 = vand.u32 %v1956, 4294901760
    %1958 = vmatpush.msra.mxu0 %v1957
    %v1959 = vand.u32 %v233, 4294901760
    %v1960 = vsub.f32 %v233, %v1959
    %v1961 = vand.u32 %v1960, 4294901760
    %v1962 = vsub.f32 %v1960, %v1961
    %v1963 = vand.u32 %v1962, 4294901760
    %1964 = vmatpush.msra.mxu0 %v1963
    %v1965 = vand.u32 %v232, 4294901760
    %v1966 = vsub.f32 %v232, %v1965
    %v1967 = vand.u32 %v1966, 4294901760
    %v1968 = vsub.f32 %v1966, %v1967
    %v1969 = vand.u32 %v1968, 4294901760
    %1970 = vmatpush.msra.mxu0 %v1969
    %v1971 = vand.u32 %v1904, 4294901760
    %1972 = vmatmul.f32.gmra.mxu0 %v1971
    %v1973 = vpop.f32.mrf.mxu0
    %v1974 = vadd.f32 %v1933, %v1973
    %1975 = vdwg.mxu0
    %1976 = vmatpush.msra.mxu0 0.0
    %1977 = vmatpush.msra.mxu0 0.0
    %1978 = vmatpush.msra.mxu0 0.0
    %1979 = vmatpush.msra.mxu0 0.0
    %1980 = vmatpush.msra.mxu0 0.0
    %1981 = vmatpush.msra.mxu0 0.0
    %1982 = vmatpush.msra.mxu0 0.0
    %1983 = vmatpush.msra.mxu0 0.0
    %1984 = vmatpush.msra.mxu0 0.0
    %1985 = vmatpush.msra.mxu0 0.0
    %1986 = vmatpush.msra.mxu0 0.0
    %1987 = vmatpush.msra.mxu0 0.0
    %v1988 = vand.u32 %v235, 4294901760
    %v1989 = vsub.f32 %v235, %v1988
    %1990 = vmatpush.msra.mxu0 %v1989
    %v1991 = vand.u32 %v234, 4294901760
    %v1992 = vsub.f32 %v234, %v1991
    %1993 = vmatpush.msra.mxu0 %v1992
    %v1994 = vand.u32 %v233, 4294901760
    %v1995 = vsub.f32 %v233, %v1994
    %1996 = vmatpush.msra.mxu0 %v1995
    %v1997 = vand.u32 %v232, 4294901760
    %v1998 = vsub.f32 %v232, %v1997
    %1999 = vmatpush.msra.mxu0 %v1998
    %v2000 = vand.u32 %v1904, 4294901760
    %v2001 = vsub.f32 %v1904, %v2000
    %2002 = vmatmul.f32.gmra.mxu0 %v2001
    %v2003 = vpop.f32.mrf.mxu0
    %v2004 = vadd.f32 %v1974, %v2003
    %2005 = vdwg.mxu0
    %2006 = vmatpush.msra.mxu0 0.0
    %2007 = vmatpush.msra.mxu0 0.0
    %2008 = vmatpush.msra.mxu0 0.0
    %2009 = vmatpush.msra.mxu0 0.0
    %2010 = vmatpush.msra.mxu0 0.0
    %2011 = vmatpush.msra.mxu0 0.0
    %2012 = vmatpush.msra.mxu0 0.0
    %2013 = vmatpush.msra.mxu0 0.0
    %2014 = vmatpush.msra.mxu0 0.0
    %2015 = vmatpush.msra.mxu0 0.0
    %2016 = vmatpush.msra.mxu0 0.0
    %2017 = vmatpush.msra.mxu0 0.0
    %v2018 = vand.u32 %v235, 4294901760
    %2019 = vmatpush.msra.mxu0 %v2018
    %v2020 = vand.u32 %v234, 4294901760
    %2021 = vmatpush.msra.mxu0 %v2020
    %v2022 = vand.u32 %v233, 4294901760
    %2023 = vmatpush.msra.mxu0 %v2022
    %v2024 = vand.u32 %v232, 4294901760
    %2025 = vmatpush.msra.mxu0 %v2024
    %v2026 = vand.u32 %v1904, 4294901760
    %v2027 = vsub.f32 %v1904, %v2026
    %v2028 = vand.u32 %v2027, 4294901760
    %2029 = vmatmul.f32.gmra.mxu0 %v2028
    %v2030 = vpop.f32.mrf.mxu0
    %v2031 = vadd.f32 %v2004, %v2030
    %2032 = vdwg.mxu0
    %2033 = vmatpush.msra.mxu0 0.0
    %2034 = vmatpush.msra.mxu0 0.0
    %2035 = vmatpush.msra.mxu0 0.0
    %2036 = vmatpush.msra.mxu0 0.0
    %2037 = vmatpush.msra.mxu0 0.0
    %2038 = vmatpush.msra.mxu0 0.0
    %2039 = vmatpush.msra.mxu0 0.0
    %2040 = vmatpush.msra.mxu0 0.0
    %2041 = vmatpush.msra.mxu0 0.0
    %2042 = vmatpush.msra.mxu0 0.0
    %2043 = vmatpush.msra.mxu0 0.0
    %2044 = vmatpush.msra.mxu0 0.0
    %v2045 = vand.u32 %v235, 4294901760
    %v2046 = vsub.f32 %v235, %v2045
    %v2047 = vand.u32 %v2046, 4294901760
    %2048 = vmatpush.msra.mxu0 %v2047
    %v2049 = vand.u32 %v234, 4294901760
    %v2050 = vsub.f32 %v234, %v2049
    %v2051 = vand.u32 %v2050, 4294901760
    %2052 = vmatpush.msra.mxu0 %v2051
    %v2053 = vand.u32 %v233, 4294901760
    %v2054 = vsub.f32 %v233, %v2053
    %v2055 = vand.u32 %v2054, 4294901760
    %2056 = vmatpush.msra.mxu0 %v2055
    %v2057 = vand.u32 %v232, 4294901760
    %v2058 = vsub.f32 %v232, %v2057
    %v2059 = vand.u32 %v2058, 4294901760
    %2060 = vmatpush.msra.mxu0 %v2059
    %v2061 = vand.u32 %v1904, 4294901760
    %2062 = vmatmul.f32.gmra.mxu0 %v2061
    %v2063 = vpop.f32.mrf.mxu0
    %v2064 = vadd.f32 %v2031, %v2063
    %2065 = vdwg.mxu0
    %2066 = vmatpush.msra.mxu0 0.0
    %2067 = vmatpush.msra.mxu0 0.0
    %2068 = vmatpush.msra.mxu0 0.0
    %2069 = vmatpush.msra.mxu0 0.0
    %2070 = vmatpush.msra.mxu0 0.0
    %2071 = vmatpush.msra.mxu0 0.0
    %2072 = vmatpush.msra.mxu0 0.0
    %2073 = vmatpush.msra.mxu0 0.0
    %2074 = vmatpush.msra.mxu0 0.0
    %2075 = vmatpush.msra.mxu0 0.0
    %2076 = vmatpush.msra.mxu0 0.0
    %2077 = vmatpush.msra.mxu0 0.0
    %v2078 = vand.u32 %v235, 4294901760
    %2079 = vmatpush.msra.mxu0 %v2078
    %v2080 = vand.u32 %v234, 4294901760
    %2081 = vmatpush.msra.mxu0 %v2080
    %v2082 = vand.u32 %v233, 4294901760
    %2083 = vmatpush.msra.mxu0 %v2082
    %v2084 = vand.u32 %v232, 4294901760
    %2085 = vmatpush.msra.mxu0 %v2084
    %v2086 = vand.u32 %v1904, 4294901760
    %2087 = vmatmul.f32.gmra.mxu0 %v2086
    %v2088 = vpop.f32.mrf.mxu0
    %v2089 = vadd.f32 %v2064, %v2088
    %2090 = vdwg.mxu0
    %v2092 = vrot.slane %v2089, 2
    %v2094 = vadd.f32 %v230, %v2092
    %v2095 = vxor.u32 %v2094, 2147483648
    %v2096 = vmul.f32 %v2095, 1.442695
    %v2097 = vpow.pop %v2096
    %v2098 = vadd.f32 %v2097, 1.0
    %v2099 = vrcp.pop %v2098
    %v2100 = vmul.f32 %v2098, %v2099
    %v2101 = vsub.f32 1.0, %v2100
    %v2102 = vmul.f32 %v2099, %v2101
    %v2103 = vadd.f32 %v2099, %v2102
    %vm2104 = vweird.f32 %v2098
    %vm2105 = vweird.f32 %v2099
    %vm2106 = vmor %vm2104, %vm2105
    %v2107 = vsel %vm2106, %v2099, %v2103
    %v2108 = vand.u32 2147483647, %v2098
    %vm2109 = vcmp.eq.f32.partialorder %v2108, 8.507059e+37
    %v2110 = vand.u32 %v2098, 2147483648
    %v2111 = vor.u32 1.1754944e-38, %v2110
    %v2112 = vsel %vm2109, %v2111, %v2107
    %v2113 = vmul.f32 1.0, %v2112
    %v2114 = vadd.f32 %v2089, %v449
    %v2116 = vrot.slane %v2114, 2
    %2117 = vrot.lane.b32.xlu0 %v2116, 64
    %v2118 = vpop.permute.xlu0 %2117
    %v2120 = vmul.f32 %v2113, %v2118
    %2122 = vrot.lane.b32.xlu0 %v2120, 64
    %v2123 = vpop.permute.xlu0 %2122
    %v2125 = vadd.f32 %v230, %v2123
    %v2126 = vtanh.pop %v2125
    %v2127 = vrot.slane %v1900, 2
    %2128 = vrot.lane.b32.xlu0 %v2127, 32
    %v2129 = vpop.permute.xlu0 %2128
    %v2131 = vsub.f32 %v2126, %v2129
    %2133 = vrot.lane.b32.xlu0 %v2131, 96
    %v2134 = vpop.permute.xlu0 %2133
    %v2136 = vmul.f32 %v2113, %v2134
    %v2138 = vrot.slane %v2136, 6
    %v2140 = vadd.f32 %v1900, %v2138
    %v2141 = vld [vmem:[%s5] sm:$0xff]
    %v2142 = vld [vmem:[%s5 + $0x8] sm:$0xff]
    %v2143 = vld [vmem:[%s5 + $0x10] sm:$0xff]
    %v2144 = vld [vmem:[%s5 + $0x18] sm:$0xff]
    %v2145 = vld [vmem:[%s6] sm:$0x1]
    %v2147 = vperm.slane %v2145, 0
    %2150 = vrot.lane.b32.xlu0 %v2140, 96
    %v2151 = vpop.permute.xlu0 %2150
    %v2152 = vsel %vm239, %v2151, 0
    %2154 = vmatpush.msra.mxu0 0.0
    %2155 = vmatpush.msra.mxu0 0.0
    %2156 = vmatpush.msra.mxu0 0.0
    %2157 = vmatpush.msra.mxu0 0.0
    %2158 = vmatpush.msra.mxu0 0.0
    %2159 = vmatpush.msra.mxu0 0.0
    %2160 = vmatpush.msra.mxu0 0.0
    %2161 = vmatpush.msra.mxu0 0.0
    %2162 = vmatpush.msra.mxu0 0.0
    %2163 = vmatpush.msra.mxu0 0.0
    %2164 = vmatpush.msra.mxu0 0.0
    %2165 = vmatpush.msra.mxu0 0.0
    %v2166 = vand.u32 %v2144, 4294901760
    %2167 = vmatpush.msra.mxu0 %v2166
    %v2168 = vand.u32 %v2143, 4294901760
    %2169 = vmatpush.msra.mxu0 %v2168
    %v2170 = vand.u32 %v2142, 4294901760
    %2171 = vmatpush.msra.mxu0 %v2170
    %v2172 = vand.u32 %v2141, 4294901760
    %2173 = vmatpush.msra.mxu0 %v2172
    %v2174 = vand.u32 %v2152, 4294901760
    %v2175 = vsub.f32 %v2152, %v2174
    %v2176 = vand.u32 %v2175, 4294901760
    %v2177 = vsub.f32 %v2175, %v2176
    %v2178 = vand.u32 %v2177, 4294901760
    %2179 = vmatmul.f32.gmra.mxu0 %v2178
    %v2180 = vpop.f32.mrf.mxu0
    %v2181 = vadd.f32 %v2147, %v2180
    %2182 = vdwg.mxu0
    %2183 = vmatpush.msra.mxu0 0.0
    %2184 = vmatpush.msra.mxu0 0.0
    %2185 = vmatpush.msra.mxu0 0.0
    %2186 = vmatpush.msra.mxu0 0.0
    %2187 = vmatpush.msra.mxu0 0.0
    %2188 = vmatpush.msra.mxu0 0.0
    %2189 = vmatpush.msra.mxu0 0.0
    %2190 = vmatpush.msra.mxu0 0.0
    %2191 = vmatpush.msra.mxu0 0.0
    %2192 = vmatpush.msra.mxu0 0.0
    %2193 = vmatpush.msra.mxu0 0.0
    %2194 = vmatpush.msra.mxu0 0.0
    %v2195 = vand.u32 %v2144, 4294901760
    %v2196 = vsub.f32 %v2144, %v2195
    %v2197 = vand.u32 %v2196, 4294901760
    %v2198 = vsub.f32 %v2196, %v2197
    %v2199 = vand.u32 %v2198, 4294901760
    %2200 = vmatpush.msra.mxu0 %v2199
    %v2201 = vand.u32 %v2143, 4294901760
    %v2202 = vsub.f32 %v2143, %v2201
    %v2203 = vand.u32 %v2202, 4294901760
    %v2204 = vsub.f32 %v2202, %v2203
    %v2205 = vand.u32 %v2204, 4294901760
    %2206 = vmatpush.msra.mxu0 %v2205
    %v2207 = vand.u32 %v2142, 4294901760
    %v2208 = vsub.f32 %v2142, %v2207
    %v2209 = vand.u32 %v2208, 4294901760
    %v2210 = vsub.f32 %v2208, %v2209
    %v2211 = vand.u32 %v2210, 4294901760
    %2212 = vmatpush.msra.mxu0 %v2211
    %v2213 = vand.u32 %v2141, 4294901760
    %v2214 = vsub.f32 %v2141, %v2213
    %v2215 = vand.u32 %v2214, 4294901760
    %v2216 = vsub.f32 %v2214, %v2215
    %v2217 = vand.u32 %v2216, 4294901760
    %2218 = vmatpush.msra.mxu0 %v2217
    %v2219 = vand.u32 %v2152, 4294901760
    %2220 = vmatmul.f32.gmra.mxu0 %v2219
    %v2221 = vpop.f32.mrf.mxu0
    %v2222 = vadd.f32 %v2181, %v2221
    %2223 = vdwg.mxu0
    %2224 = vmatpush.msra.mxu0 0.0
    %2225 = vmatpush.msra.mxu0 0.0
    %2226 = vmatpush.msra.mxu0 0.0
    %2227 = vmatpush.msra.mxu0 0.0
    %2228 = vmatpush.msra.mxu0 0.0
    %2229 = vmatpush.msra.mxu0 0.0
    %2230 = vmatpush.msra.mxu0 0.0
    %2231 = vmatpush.msra.mxu0 0.0
    %2232 = vmatpush.msra.mxu0 0.0
    %2233 = vmatpush.msra.mxu0 0.0
    %2234 = vmatpush.msra.mxu0 0.0
    %2235 = vmatpush.msra.mxu0 0.0
    %v2236 = vand.u32 %v2144, 4294901760
    %v2237 = vsub.f32 %v2144, %v2236
    %2238 = vmatpush.msra.mxu0 %v2237
    %v2239 = vand.u32 %v2143, 4294901760
    %v2240 = vsub.f32 %v2143, %v2239
    %2241 = vmatpush.msra.mxu0 %v2240
    %v2242 = vand.u32 %v2142, 4294901760
    %v2243 = vsub.f32 %v2142, %v2242
    %2244 = vmatpush.msra.mxu0 %v2243
    %v2245 = vand.u32 %v2141, 4294901760
    %v2246 = vsub.f32 %v2141, %v2245
    %2247 = vmatpush.msra.mxu0 %v2246
    %v2248 = vand.u32 %v2152, 4294901760
    %v2249 = vsub.f32 %v2152, %v2248
    %2250 = vmatmul.f32.gmra.mxu0 %v2249
    %v2251 = vpop.f32.mrf.mxu0
    %v2252 = vadd.f32 %v2222, %v2251
    %2253 = vdwg.mxu0
    %2254 = vmatpush.msra.mxu0 0.0
    %2255 = vmatpush.msra.mxu0 0.0
    %2256 = vmatpush.msra.mxu0 0.0
    %2257 = vmatpush.msra.mxu0 0.0
    %2258 = vmatpush.msra.mxu0 0.0
    %2259 = vmatpush.msra.mxu0 0.0
    %2260 = vmatpush.msra.mxu0 0.0
    %2261 = vmatpush.msra.mxu0 0.0
    %2262 = vmatpush.msra.mxu0 0.0
    %2263 = vmatpush.msra.mxu0 0.0
    %2264 = vmatpush.msra.mxu0 0.0
    %2265 = vmatpush.msra.mxu0 0.0
    %v2266 = vand.u32 %v2144, 4294901760
    %2267 = vmatpush.msra.mxu0 %v2266
    %v2268 = vand.u32 %v2143, 4294901760
    %2269 = vmatpush.msra.mxu0 %v2268
    %v2270 = vand.u32 %v2142, 4294901760
    %2271 = vmatpush.msra.mxu0 %v2270
    %v2272 = vand.u32 %v2141, 4294901760
    %2273 = vmatpush.msra.mxu0 %v2272
    %v2274 = vand.u32 %v2152, 4294901760
    %v2275 = vsub.f32 %v2152, %v2274
    %v2276 = vand.u32 %v2275, 4294901760
    %2277 = vmatmul.f32.gmra.mxu0 %v2276
    %v2278 = vpop.f32.mrf.mxu0
    %v2279 = vadd.f32 %v2252, %v2278
    %2280 = vdwg.mxu0
    %2281 = vmatpush.msra.mxu0 0.0
    %2282 = vmatpush.msra.mxu0 0.0
    %2283 = vmatpush.msra.mxu0 0.0
    %2284 = vmatpush.msra.mxu0 0.0
    %2285 = vmatpush.msra.mxu0 0.0
    %2286 = vmatpush.msra.mxu0 0.0
    %2287 = vmatpush.msra.mxu0 0.0
    %2288 = vmatpush.msra.mxu0 0.0
    %2289 = vmatpush.msra.mxu0 0.0
    %2290 = vmatpush.msra.mxu0 0.0
    %2291 = vmatpush.msra.mxu0 0.0
    %2292 = vmatpush.msra.mxu0 0.0
    %v2293 = vand.u32 %v2144, 4294901760
    %v2294 = vsub.f32 %v2144, %v2293
    %v2295 = vand.u32 %v2294, 4294901760
    %2296 = vmatpush.msra.mxu0 %v2295
    %v2297 = vand.u32 %v2143, 4294901760
    %v2298 = vsub.f32 %v2143, %v2297
    %v2299 = vand.u32 %v2298, 4294901760
    %2300 = vmatpush.msra.mxu0 %v2299
    %v2301 = vand.u32 %v2142, 4294901760
    %v2302 = vsub.f32 %v2142, %v2301
    %v2303 = vand.u32 %v2302, 4294901760
    %2304 = vmatpush.msra.mxu0 %v2303
    %v2305 = vand.u32 %v2141, 4294901760
    %v2306 = vsub.f32 %v2141, %v2305
    %v2307 = vand.u32 %v2306, 4294901760
    %2308 = vmatpush.msra.mxu0 %v2307
    %v2309 = vand.u32 %v2152, 4294901760
    %2310 = vmatmul.f32.gmra.mxu0 %v2309
    %v2311 = vpop.f32.mrf.mxu0
    %v2312 = vadd.f32 %v2279, %v2311
    %2313 = vdwg.mxu0
    %2314 = vmatpush.msra.mxu0 0.0
    %2315 = vmatpush.msra.mxu0 0.0
    %2316 = vmatpush.msra.mxu0 0.0
    %2317 = vmatpush.msra.mxu0 0.0
    %2318 = vmatpush.msra.mxu0 0.0
    %2319 = vmatpush.msra.mxu0 0.0
    %2320 = vmatpush.msra.mxu0 0.0
    %2321 = vmatpush.msra.mxu0 0.0
    %2322 = vmatpush.msra.mxu0 0.0
    %2323 = vmatpush.msra.mxu0 0.0
    %2324 = vmatpush.msra.mxu0 0.0
    %2325 = vmatpush.msra.mxu0 0.0
    %v2326 = vand.u32 %v2144, 4294901760
    %2327 = vmatpush.msra.mxu0 %v2326
    %v2328 = vand.u32 %v2143, 4294901760
    %2329 = vmatpush.msra.mxu0 %v2328
    %v2330 = vand.u32 %v2142, 4294901760
    %2331 = vmatpush.msra.mxu0 %v2330
    %v2332 = vand.u32 %v2141, 4294901760
    %2333 = vmatpush.msra.mxu0 %v2332
    %v2334 = vand.u32 %v2152, 4294901760
    %2335 = vmatmul.f32.gmra.mxu0 %v2334
    %v2336 = vpop.f32.mrf.mxu0
    %v2337 = vadd.f32 %v2312, %v2336
    %2338 = vdwg.mxu0
    %vm2339 = vcmask 58368
    %2340 = vst.msk [vmem:[#allocation2] sm:$0x3] %vm2339, %v2337
    // Predicated region
    $region30: #{custom_gru_forward.1} parent=1 // pred_check
      _
    $region31: #{custom_gru_forward.1} parent=1 // pred_check_branch
      %2342 = sbr.rel (0) target = $region33
    $region32: #{custom_gru_forward.1} parent=1 // pred_region
      %2344 = vsyncadd [#allocation3], 0
      %s2346 = sshll.u32 [#allocation2], 4
      %s2347 = int_to_ptr.vmem [resolvable:$true] %s2346
      %s2348 = sshll.u32 %s7, 4
      %s2349 = int_to_ptr.hbm [resolvable:$true] %s2348
      %2351 = dma.vmem_to_hbm [thread:$0]  %s2347, 32, %s2349, [#allocation3]
    $region33: #{custom_gru_forward.1} parent=1 // pred_fallthru
      _
    // Predicated region
    $region34: #{custom_gru_forward.1} parent=1 // pred_check
      _
    $region35: #{custom_gru_forward.1} parent=1 // pred_check_branch
      %2353 = sbr.rel (0) target = $region37
    $region36: #{custom_gru_forward.1} parent=1 // pred_region
      %2355 = dma.done [#allocation3], 32
    $region37: #{custom_gru_forward.1} parent=1 // pred_fallthru
      _
    %2356 = vsyncpa [#allocation3], 1

</llo_original>
